<compile_context>
chip_gen: v5e
topology: v5e:2x2
jax: 0.10.0
libtpu: 0.0.40
codegen_flags: <defaults>
</compile_context>

<pallas_src>
import functools

import jax
import jax.numpy as jnp
from jax.experimental import pallas as pl
from jax.experimental.pallas import tpu as pltpu


# ------------------------------ fused kernel --------------------------------

def _layernorm(z, g, b, eps):
    mean = jnp.mean(z, axis=-1, keepdims=True)
    cent = z - mean
    var = jnp.mean(cent * cent, axis=-1, keepdims=True)
    return cent * jax.lax.rsqrt(var + eps) * g + b


def _transformer_kernel(x_ref, bias_ref, hmask_ref,
                        wq_ref, wk_ref, wv_ref, bq_ref, bk_ref, bv_ref,
                        wo_ref, bo_ref, g1_ref, c1_ref,
                        wf1_ref, bf1_ref, wf2_ref, bf2_ref, g2_ref, c2_ref,
                        wd_ref, bd_ref, o_ref, *, nlayers, nhead, scale, eps):
    h = x_ref[...]              # (Tb, E) activation rows of this grid block
    bias = bias_ref[...]        # (Tb, Tb) additive mask: 0 inside an attention
                                # group, -1e30 across groups (block diagonal)
    hm = hmask_ref[...]         # (H, E) per-head column masks

    for i in range(nlayers):    # static unroll; weights indexed out of VMEM
        # ---------- multi-head self-attention (post-norm encoder layer) -----
        q = jnp.dot(h, wq_ref[i], preferred_element_type=jnp.float32) + bq_ref[i]
        k = jnp.dot(h, wk_ref[i], preferred_element_type=jnp.float32) + bk_ref[i]
        v = jnp.dot(h, wv_ref[i], preferred_element_type=jnp.float32) + bv_ref[i]

        attn = jnp.zeros_like(h)
        for hh in range(nhead):
            mh = hm[hh:hh + 1, :]                              # (1, E)
            # per-head scores: mask q's columns to head hh, contract over E
            s = jax.lax.dot_general(q * mh, k, (((1,), (1,)), ((), ())),
                                    preferred_element_type=jnp.float32)
            s = s * scale + bias                               # (Tb, Tb)
            s = s - jnp.max(s, axis=-1, keepdims=True)
            e = jnp.exp(s)
            p = e * pl.reciprocal(jnp.sum(e, axis=-1, keepdims=True),
                                  approx=True)
            attn = attn + jnp.dot(p, v,
                                  preferred_element_type=jnp.float32) * mh

        attn = jnp.dot(attn, wo_ref[i],
                       preferred_element_type=jnp.float32) + bo_ref[i]
        h = _layernorm(h + attn, g1_ref[i], c1_ref[i], eps)

        # ---------- feed-forward (ReLU, dropout=0) ---------------------------
        ff = jnp.dot(h, wf1_ref[i], preferred_element_type=jnp.float32) + bf1_ref[i]
        ff = jnp.maximum(ff, 0.0)
        ff = jnp.dot(ff, wf2_ref[i], preferred_element_type=jnp.float32) + bf2_ref[i]
        h = _layernorm(h + ff, g2_ref[i], c2_ref[i], eps)

    # ---------- decoder Linear, lane-dense (padded to 128) store -------------
    o_ref[...] = (jnp.dot(h, wd_ref[...], preferred_element_type=jnp.float32)
                  + bd_ref[...])


# ------------------------- parameter initialization -------------------------

PARAM_ORDER = ("hmask", "wq", "wk", "wv", "bq", "bk", "bv", "wo", "bo",
               "g1", "c1", "wf1", "bf1", "wf2", "bf2", "g2", "c2",
               "dec_w", "dec_b")


def init_params(key, embdim, outdim, nlayers, nhead, nhid):
    """Random params, pre-transposed / pre-reshaped / stacked per layer so the
    forward pass does zero weight massaging at call time."""
    E, H = embdim, nhead
    hd = E // H
    sc = 0.05

    def rnd(k, shape):
        return jax.random.normal(k, shape, jnp.float32) * sc

    cols = {n: [] for n in ("wq", "wk", "wv", "bq", "bk", "bv", "wo", "bo",
                            "g1", "c1", "wf1", "bf1", "wf2", "bf2", "g2", "c2")}
    for _ in range(nlayers):
        key, *ks = jax.random.split(key, 9)
        in_w = rnd(ks[0], (3 * E, E))           # PyTorch in_proj_weight layout
        in_b = rnd(ks[1], (3 * E,))
        cols["wq"].append(in_w[:E].T);        cols["bq"].append(in_b[:E].reshape(1, E))
        cols["wk"].append(in_w[E:2 * E].T);   cols["bk"].append(in_b[E:2 * E].reshape(1, E))
        cols["wv"].append(in_w[2 * E:].T);    cols["bv"].append(in_b[2 * E:].reshape(1, E))
        cols["wo"].append(rnd(ks[2], (E, E)).T)
        cols["bo"].append(rnd(ks[3], (E,)).reshape(1, E))
        cols["g1"].append(jnp.ones((1, E), jnp.float32))
        cols["c1"].append(jnp.zeros((1, E), jnp.float32))
        cols["wf1"].append(rnd(ks[4], (nhid, E)).T)
        cols["bf1"].append(rnd(ks[5], (nhid,)).reshape(1, nhid))
        cols["wf2"].append(rnd(ks[6], (E, nhid)).T)
        cols["bf2"].append(rnd(ks[7], (E,)).reshape(1, E))
        cols["g2"].append(jnp.ones((1, E), jnp.float32))
        cols["c2"].append(jnp.zeros((1, E), jnp.float32))

    key, k1, k2 = jax.random.split(key, 3)
    out_pad = ((outdim + 127) // 128) * 128     # lane-dense decoder output
    dec_w = jnp.pad(rnd(k1, (outdim, E)).T, ((0, 0), (0, out_pad - outdim)))
    dec_b = jnp.pad(rnd(k2, (outdim,)), ((0, out_pad - outdim),)).reshape(1, out_pad)

    # per-head column masks used to split heads inside the fused kernel
    hmask = (jnp.arange(E)[None, :] // hd == jnp.arange(H)[:, None]).astype(jnp.float32)

    params = {name: jnp.stack(vals, axis=0) for name, vals in cols.items()}
    params.update({"hmask": hmask, "dec_w": dec_w, "dec_b": dec_b})
    return params


# ------------------------------ forward pass ---------------------------------

def _pick_grid(T, group):
    """Largest row-block count whose blocks are (8,·)-aligned and hold whole
    attention groups (gives v7x's two TensorCores independent work)."""
    for g in (2, 1):
        tb = T // g
        if T % g == 0 and tb % 8 == 0 and tb % group == 0:
            return g
    return 1


def transformer_forward(src, params, *, embdim, outdim, nhead, nlayers):
    """Matches PyTorch Transformer.forward: zero_pad -> transpose(0,1) ->
    post-norm TransformerEncoder (ReLU FFN, dropout=0) -> decoder Linear ->
    transpose back.  The transpose(0,1) is baked into the row ordering."""
    S, B, C = src.shape
    E = embdim
    assert C <= E and E % nhead == 0
    T = S * B
    out_pad = params["dec_w"].shape[1]

    # zero_pad + flatten; row = s*B + b, so each attention group (fixed s,
    # varying b — the axis PyTorch attends over here) is B consecutive rows.
    x = jnp.pad(src.astype(jnp.float32), ((0, 0), (0, 0), (0, E - C))).reshape(T, E)

    nblk = _pick_grid(T, B)
    tb = T // nblk

    # additive block-diagonal attention mask (same pattern in every block)
    gid = jnp.arange(tb) // B
    attn_bias = jnp.where(gid[:, None] == gid[None, :], 0.0, -1e30).astype(jnp.float32)

    weights = [params[k] for k in PARAM_ORDER]

    kernel = functools.partial(
        _transformer_kernel, nlayers=nlayers, nhead=nhead,
        scale=1.0 / float(E // nhead) ** 0.5, eps=1e-5)

    def rep(a):  # whole array, VMEM-resident, same block for every grid step
        return pl.BlockSpec(a.shape, lambda i, n=a.ndim: (0,) * n)

    out = pl.pallas_call(
        kernel,
        out_shape=jax.ShapeDtypeStruct((T, out_pad), jnp.float32),
        grid=(nblk,),
        in_specs=[pl.BlockSpec((tb, E), lambda i: (i, 0)),   # activation rows
                  rep(attn_bias)] + [rep(w) for w in weights],
        out_specs=pl.BlockSpec((tb, out_pad), lambda i: (i, 0)),
        compiler_params=pltpu.CompilerParams(dimension_semantics=("parallel",)),
    )(x, attn_bias, *weights)

    # rows are already in (s, b) order, so reshape + slice IS the final
    # (seq_len, batch, outdim) output — no trailing transpose needed.
    return out.reshape(S, B, out_pad)[:, :, :outdim]


# ---------------------------------- main -------------------------------------

if __name__ == "__main__":
    EMBDIM, OUTDIM, NLAYERS, NHEAD, NHID = 32, 8, 2, 2, 64
    S, B, INCHAN = 8, 2, 16   # seq_len, batch, input channels (<= embdim)

    key = jax.random.PRNGKey(0)
    kp, kx = jax.random.split(key)
    params = init_params(kp, EMBDIM, OUTDIM, NLAYERS, NHEAD, NHID)
    src = jax.random.normal(kx, (S, B, INCHAN), jnp.float32)

    fwd = jax.jit(functools.partial(transformer_forward, embdim=EMBDIM,
                                    outdim=OUTDIM, nhead=NHEAD, nlayers=NLAYERS))
    out = jax.block_until_ready(fwd(src, params))
    assert out.shape == (S, B, OUTDIM), out.shape
    assert bool(jnp.all(jnp.isfinite(out)))
    print("KERNEL_OK")
</pallas_src>

<mosaic_0001>
module attributes {stable_mosaic.version = 11 : i64} {
  func.func @_transformer_kernel(%arg0: i32, %arg1: memref<8x32xf32, #tpu.memory_space<vmem>>, %arg2: memref<8x8xf32, #tpu.memory_space<vmem>>, %arg3: memref<2x32xf32, #tpu.memory_space<vmem>>, %arg4: memref<2x32x32xf32, #tpu.memory_space<vmem>>, %arg5: memref<2x32x32xf32, #tpu.memory_space<vmem>>, %arg6: memref<2x32x32xf32, #tpu.memory_space<vmem>>, %arg7: memref<2x1x32xf32, #tpu.memory_space<vmem>>, %arg8: memref<2x1x32xf32, #tpu.memory_space<vmem>>, %arg9: memref<2x1x32xf32, #tpu.memory_space<vmem>>, %arg10: memref<2x32x32xf32, #tpu.memory_space<vmem>>, %arg11: memref<2x1x32xf32, #tpu.memory_space<vmem>>, %arg12: memref<2x1x32xf32, #tpu.memory_space<vmem>>, %arg13: memref<2x1x32xf32, #tpu.memory_space<vmem>>, %arg14: memref<2x32x64xf32, #tpu.memory_space<vmem>>, %arg15: memref<2x1x64xf32, #tpu.memory_space<vmem>>, %arg16: memref<2x64x32xf32, #tpu.memory_space<vmem>>, %arg17: memref<2x1x32xf32, #tpu.memory_space<vmem>>, %arg18: memref<2x1x32xf32, #tpu.memory_space<vmem>>, %arg19: memref<2x1x32xf32, #tpu.memory_space<vmem>>, %arg20: memref<32x128xf32, #tpu.memory_space<vmem>>, %arg21: memref<1x128xf32, #tpu.memory_space<vmem>>, %arg22: memref<8x128xf32, #tpu.memory_space<vmem>>) attributes {dimension_semantics = [#tpu.dimension_semantics<parallel>], iteration_bounds = array<i64: 2>, scalar_prefetch = 0 : i64, scratch_operands = 0 : i64, tpu.core_type = #tpu.core_type<tc>, window_params = [{transform_indices = @transform_0, window_bounds = array<i64: 8, 32>}, {pipeline_mode = #tpu.pipeline_mode<synchronous>, transform_indices = @transform_1, window_bounds = array<i64: 8, 8>}, {pipeline_mode = #tpu.pipeline_mode<synchronous>, transform_indices = @transform_2, window_bounds = array<i64: 2, 32>}, {pipeline_mode = #tpu.pipeline_mode<synchronous>, transform_indices = @transform_3, window_bounds = array<i64: 2, 32, 32>}, {pipeline_mode = #tpu.pipeline_mode<synchronous>, transform_indices = @transform_4, window_bounds = array<i64: 2, 32, 32>}, {pipeline_mode = #tpu.pipeline_mode<synchronous>, transform_indices = @transform_5, window_bounds = array<i64: 2, 32, 32>}, {pipeline_mode = #tpu.pipeline_mode<synchronous>, transform_indices = @transform_6, window_bounds = array<i64: 2, 1, 32>}, {pipeline_mode = #tpu.pipeline_mode<synchronous>, transform_indices = @transform_7, window_bounds = array<i64: 2, 1, 32>}, {pipeline_mode = #tpu.pipeline_mode<synchronous>, transform_indices = @transform_8, window_bounds = array<i64: 2, 1, 32>}, {pipeline_mode = #tpu.pipeline_mode<synchronous>, transform_indices = @transform_9, window_bounds = array<i64: 2, 32, 32>}, {pipeline_mode = #tpu.pipeline_mode<synchronous>, transform_indices = @transform_10, window_bounds = array<i64: 2, 1, 32>}, {pipeline_mode = #tpu.pipeline_mode<synchronous>, transform_indices = @transform_11, window_bounds = array<i64: 2, 1, 32>}, {pipeline_mode = #tpu.pipeline_mode<synchronous>, transform_indices = @transform_12, window_bounds = array<i64: 2, 1, 32>}, {pipeline_mode = #tpu.pipeline_mode<synchronous>, transform_indices = @transform_13, window_bounds = array<i64: 2, 32, 64>}, {pipeline_mode = #tpu.pipeline_mode<synchronous>, transform_indices = @transform_14, window_bounds = array<i64: 2, 1, 64>}, {pipeline_mode = #tpu.pipeline_mode<synchronous>, transform_indices = @transform_15, window_bounds = array<i64: 2, 64, 32>}, {pipeline_mode = #tpu.pipeline_mode<synchronous>, transform_indices = @transform_16, window_bounds = array<i64: 2, 1, 32>}, {pipeline_mode = #tpu.pipeline_mode<synchronous>, transform_indices = @transform_17, window_bounds = array<i64: 2, 1, 32>}, {pipeline_mode = #tpu.pipeline_mode<synchronous>, transform_indices = @transform_18, window_bounds = array<i64: 2, 1, 32>}, {pipeline_mode = #tpu.pipeline_mode<synchronous>, transform_indices = @transform_19, window_bounds = array<i64: 32, 128>}, {pipeline_mode = #tpu.pipeline_mode<synchronous>, transform_indices = @transform_20, window_bounds = array<i64: 1, 128>}, {transform_indices = @transform_21, window_bounds = array<i64: 8, 128>}]} {
    %c0 = arith.constant 0 : index
    %c0_0 = arith.constant 0 : index
    %0 = vector.load %arg1[%c0, %c0_0] : memref<8x32xf32, #tpu.memory_space<vmem>>, vector<8x32xf32>
    %c0_1 = arith.constant 0 : index
    %c0_2 = arith.constant 0 : index
    %1 = vector.load %arg2[%c0_1, %c0_2] : memref<8x8xf32, #tpu.memory_space<vmem>>, vector<8x8xf32>
    %c0_3 = arith.constant 0 : index
    %c0_4 = arith.constant 0 : index
    %2 = vector.load %arg3[%c0_3, %c0_4] : memref<2x32xf32, #tpu.memory_space<vmem>>, vector<2x32xf32>
    %c0_5 = arith.constant 0 : index
    %c0_6 = arith.constant 0 : index
    %c0_7 = arith.constant 0 : index
    %3 = vector.load %arg4[%c0_5, %c0_6, %c0_7] : memref<2x32x32xf32, #tpu.memory_space<vmem>>, vector<1x32x32xf32>
    %4 = vector.shape_cast %3 : vector<1x32x32xf32> to vector<32x32xf32>
    %cst = arith.constant dense<0.000000e+00> : vector<8x32xf32>
    %5 = tpu.matmul %0, %4, %cst {dimension_numbers = #tpu.dot_dimension_numbers<[1], [0], [0], [1], [0, 0, 1, 1], [], []>} : vector<8x32xf32>, vector<32x32xf32>, vector<8x32xf32> -> vector<8x32xf32>
    %c0_8 = arith.constant 0 : index
    %c0_9 = arith.constant 0 : index
    %c0_10 = arith.constant 0 : index
    %6 = vector.load %arg7[%c0_8, %c0_9, %c0_10] : memref<2x1x32xf32, #tpu.memory_space<vmem>>, vector<1x1x32xf32>
    %7 = vector.shape_cast %6 : vector<1x1x32xf32> to vector<1x32xf32>
    %8 = vector.broadcast %7 : vector<1x32xf32> to vector<8x32xf32>
    %9 = arith.addf %5, %8 : vector<8x32xf32>
    %c0_11 = arith.constant 0 : index
    %c0_12 = arith.constant 0 : index
    %c0_13 = arith.constant 0 : index
    %10 = vector.load %arg5[%c0_11, %c0_12, %c0_13] : memref<2x32x32xf32, #tpu.memory_space<vmem>>, vector<1x32x32xf32>
    %11 = vector.shape_cast %10 : vector<1x32x32xf32> to vector<32x32xf32>
    %cst_14 = arith.constant dense<0.000000e+00> : vector<8x32xf32>
    %12 = tpu.matmul %0, %11, %cst_14 {dimension_numbers = #tpu.dot_dimension_numbers<[1], [0], [0], [1], [0, 0, 1, 1], [], []>} : vector<8x32xf32>, vector<32x32xf32>, vector<8x32xf32> -> vector<8x32xf32>
    %c0_15 = arith.constant 0 : index
    %c0_16 = arith.constant 0 : index
    %c0_17 = arith.constant 0 : index
    %13 = vector.load %arg8[%c0_15, %c0_16, %c0_17] : memref<2x1x32xf32, #tpu.memory_space<vmem>>, vector<1x1x32xf32>
    %14 = vector.shape_cast %13 : vector<1x1x32xf32> to vector<1x32xf32>
    %15 = vector.broadcast %14 : vector<1x32xf32> to vector<8x32xf32>
    %16 = arith.addf %12, %15 : vector<8x32xf32>
    %c0_18 = arith.constant 0 : index
    %c0_19 = arith.constant 0 : index
    %c0_20 = arith.constant 0 : index
    %17 = vector.load %arg6[%c0_18, %c0_19, %c0_20] : memref<2x32x32xf32, #tpu.memory_space<vmem>>, vector<1x32x32xf32>
    %18 = vector.shape_cast %17 : vector<1x32x32xf32> to vector<32x32xf32>
    %cst_21 = arith.constant dense<0.000000e+00> : vector<8x32xf32>
    %19 = tpu.matmul %0, %18, %cst_21 {dimension_numbers = #tpu.dot_dimension_numbers<[1], [0], [0], [1], [0, 0, 1, 1], [], []>} : vector<8x32xf32>, vector<32x32xf32>, vector<8x32xf32> -> vector<8x32xf32>
    %c0_22 = arith.constant 0 : index
    %c0_23 = arith.constant 0 : index
    %c0_24 = arith.constant 0 : index
    %20 = vector.load %arg9[%c0_22, %c0_23, %c0_24] : memref<2x1x32xf32, #tpu.memory_space<vmem>>, vector<1x1x32xf32>
    %21 = vector.shape_cast %20 : vector<1x1x32xf32> to vector<1x32xf32>
    %22 = vector.broadcast %21 : vector<1x32xf32> to vector<8x32xf32>
    %23 = arith.addf %19, %22 : vector<8x32xf32>
    %cst_25 = arith.constant 0.000000e+00 : f32
    %24 = vector.broadcast %cst_25 : f32 to vector<8x32xf32>
    %25 = vector.extract_strided_slice %2 {offsets = [0, 0], sizes = [1, 32], strides = [1, 1]} : vector<2x32xf32> to vector<1x32xf32>
    %26 = vector.broadcast %25 : vector<1x32xf32> to vector<8x32xf32>
    %27 = arith.mulf %9, %26 : vector<8x32xf32>
    %cst_26 = arith.constant dense<0.000000e+00> : vector<8x8xf32>
    %28 = tpu.matmul %27, %16, %cst_26 {dimension_numbers = #tpu.dot_dimension_numbers<[1], [1], [0], [0], [0, 0, 1, 0], [], []>} : vector<8x32xf32>, vector<8x32xf32>, vector<8x8xf32> -> vector<8x8xf32>
    %cst_27 = arith.constant 2.500000e-01 : f32
    %29 = vector.broadcast %cst_27 : f32 to vector<8x8xf32>
    %30 = arith.mulf %28, %29 : vector<8x8xf32>
    %31 = arith.addf %30, %1 : vector<8x8xf32>
    %cst_28 = arith.constant dense<0xFF800000> : vector<8xf32>
    %32 = vector.multi_reduction <maximumf>, %31, %cst_28 [1] : vector<8x8xf32> to vector<8xf32>
    %33 = vector.shape_cast %32 : vector<8xf32> to vector<8x1xf32>
    %34 = vector.broadcast %33 : vector<8x1xf32> to vector<8x8xf32>
    %35 = arith.subf %31, %34 : vector<8x8xf32>
    %36 = math.exp %35 : vector<8x8xf32>
    %cst_29 = arith.constant dense<0.000000e+00> : vector<8xf32>
    %37 = vector.multi_reduction <add>, %36, %cst_29 [1] : vector<8x8xf32> to vector<8xf32>
    %38 = vector.shape_cast %37 : vector<8xf32> to vector<8x1xf32>
    %39 = tpu.reciprocal %38 {approx = true} : vector<8x1xf32> -> vector<8x1xf32>
    %40 = vector.broadcast %39 : vector<8x1xf32> to vector<8x8xf32>
    %41 = arith.mulf %36, %40 : vector<8x8xf32>
    %cst_30 = arith.constant dense<0.000000e+00> : vector<8x32xf32>
    %42 = tpu.matmul %41, %23, %cst_30 {dimension_numbers = #tpu.dot_dimension_numbers<[1], [0], [0], [1], [0, 0, 1, 1], [], []>} : vector<8x8xf32>, vector<8x32xf32>, vector<8x32xf32> -> vector<8x32xf32>
    %43 = vector.broadcast %25 : vector<1x32xf32> to vector<8x32xf32>
    %44 = arith.mulf %42, %43 : vector<8x32xf32>
    %45 = arith.addf %24, %44 : vector<8x32xf32>
    %46 = vector.extract_strided_slice %2 {offsets = [1, 0], sizes = [1, 32], strides = [1, 1]} : vector<2x32xf32> to vector<1x32xf32>
    %47 = vector.broadcast %46 : vector<1x32xf32> to vector<8x32xf32>
    %48 = arith.mulf %9, %47 : vector<8x32xf32>
    %cst_31 = arith.constant dense<0.000000e+00> : vector<8x8xf32>
    %49 = tpu.matmul %48, %16, %cst_31 {dimension_numbers = #tpu.dot_dimension_numbers<[1], [1], [0], [0], [0, 0, 1, 0], [], []>} : vector<8x32xf32>, vector<8x32xf32>, vector<8x8xf32> -> vector<8x8xf32>
    %cst_32 = arith.constant 2.500000e-01 : f32
    %50 = vector.broadcast %cst_32 : f32 to vector<8x8xf32>
    %51 = arith.mulf %49, %50 : vector<8x8xf32>
    %52 = arith.addf %51, %1 : vector<8x8xf32>
    %cst_33 = arith.constant dense<0xFF800000> : vector<8xf32>
    %53 = vector.multi_reduction <maximumf>, %52, %cst_33 [1] : vector<8x8xf32> to vector<8xf32>
    %54 = vector.shape_cast %53 : vector<8xf32> to vector<8x1xf32>
    %55 = vector.broadcast %54 : vector<8x1xf32> to vector<8x8xf32>
    %56 = arith.subf %52, %55 : vector<8x8xf32>
    %57 = math.exp %56 : vector<8x8xf32>
    %cst_34 = arith.constant dense<0.000000e+00> : vector<8xf32>
    %58 = vector.multi_reduction <add>, %57, %cst_34 [1] : vector<8x8xf32> to vector<8xf32>
    %59 = vector.shape_cast %58 : vector<8xf32> to vector<8x1xf32>
    %60 = tpu.reciprocal %59 {approx = true} : vector<8x1xf32> -> vector<8x1xf32>
    %61 = vector.broadcast %60 : vector<8x1xf32> to vector<8x8xf32>
    %62 = arith.mulf %57, %61 : vector<8x8xf32>
    %cst_35 = arith.constant dense<0.000000e+00> : vector<8x32xf32>
    %63 = tpu.matmul %62, %23, %cst_35 {dimension_numbers = #tpu.dot_dimension_numbers<[1], [0], [0], [1], [0, 0, 1, 1], [], []>} : vector<8x8xf32>, vector<8x32xf32>, vector<8x32xf32> -> vector<8x32xf32>
    %64 = vector.broadcast %46 : vector<1x32xf32> to vector<8x32xf32>
    %65 = arith.mulf %63, %64 : vector<8x32xf32>
    %66 = arith.addf %45, %65 : vector<8x32xf32>
    %c0_36 = arith.constant 0 : index
    %c0_37 = arith.constant 0 : index
    %c0_38 = arith.constant 0 : index
    %67 = vector.load %arg10[%c0_36, %c0_37, %c0_38] : memref<2x32x32xf32, #tpu.memory_space<vmem>>, vector<1x32x32xf32>
    %68 = vector.shape_cast %67 : vector<1x32x32xf32> to vector<32x32xf32>
    %cst_39 = arith.constant dense<0.000000e+00> : vector<8x32xf32>
    %69 = tpu.matmul %66, %68, %cst_39 {dimension_numbers = #tpu.dot_dimension_numbers<[1], [0], [0], [1], [0, 0, 1, 1], [], []>} : vector<8x32xf32>, vector<32x32xf32>, vector<8x32xf32> -> vector<8x32xf32>
    %c0_40 = arith.constant 0 : index
    %c0_41 = arith.constant 0 : index
    %c0_42 = arith.constant 0 : index
    %70 = vector.load %arg11[%c0_40, %c0_41, %c0_42] : memref<2x1x32xf32, #tpu.memory_space<vmem>>, vector<1x1x32xf32>
    %71 = vector.shape_cast %70 : vector<1x1x32xf32> to vector<1x32xf32>
    %72 = vector.broadcast %71 : vector<1x32xf32> to vector<8x32xf32>
    %73 = arith.addf %69, %72 : vector<8x32xf32>
    %74 = arith.addf %0, %73 : vector<8x32xf32>
    %c0_43 = arith.constant 0 : index
    %c0_44 = arith.constant 0 : index
    %c0_45 = arith.constant 0 : index
    %75 = vector.load %arg12[%c0_43, %c0_44, %c0_45] : memref<2x1x32xf32, #tpu.memory_space<vmem>>, vector<1x1x32xf32>
    %76 = vector.shape_cast %75 : vector<1x1x32xf32> to vector<1x32xf32>
    %c0_46 = arith.constant 0 : index
    %c0_47 = arith.constant 0 : index
    %c0_48 = arith.constant 0 : index
    %77 = vector.load %arg13[%c0_46, %c0_47, %c0_48] : memref<2x1x32xf32, #tpu.memory_space<vmem>>, vector<1x1x32xf32>
    %78 = vector.shape_cast %77 : vector<1x1x32xf32> to vector<1x32xf32>
    %cst_49 = arith.constant dense<0.000000e+00> : vector<8xf32>
    %79 = vector.multi_reduction <add>, %74, %cst_49 [1] : vector<8x32xf32> to vector<8xf32>
    %80 = vector.shape_cast %79 : vector<8xf32> to vector<8x1xf32>
    %cst_50 = arith.constant 3.200000e+01 : f32
    %81 = vector.broadcast %cst_50 : f32 to vector<8x1xf32>
    %82 = arith.divf %80, %81 : vector<8x1xf32>
    %83 = vector.broadcast %82 : vector<8x1xf32> to vector<8x32xf32>
    %84 = arith.subf %74, %83 : vector<8x32xf32>
    %85 = arith.mulf %84, %84 : vector<8x32xf32>
    %cst_51 = arith.constant dense<0.000000e+00> : vector<8xf32>
    %86 = vector.multi_reduction <add>, %85, %cst_51 [1] : vector<8x32xf32> to vector<8xf32>
    %87 = vector.shape_cast %86 : vector<8xf32> to vector<8x1xf32>
    %cst_52 = arith.constant 3.200000e+01 : f32
    %88 = vector.broadcast %cst_52 : f32 to vector<8x1xf32>
    %89 = arith.divf %87, %88 : vector<8x1xf32>
    %cst_53 = arith.constant 9.99999974E-6 : f32
    %90 = vector.broadcast %cst_53 : f32 to vector<8x1xf32>
    %91 = arith.addf %89, %90 : vector<8x1xf32>
    %92 = math.rsqrt %91 : vector<8x1xf32>
    %93 = vector.broadcast %92 : vector<8x1xf32> to vector<8x32xf32>
    %94 = arith.mulf %84, %93 : vector<8x32xf32>
    %95 = vector.broadcast %76 : vector<1x32xf32> to vector<8x32xf32>
    %96 = arith.mulf %94, %95 : vector<8x32xf32>
    %97 = vector.broadcast %78 : vector<1x32xf32> to vector<8x32xf32>
    %98 = arith.addf %96, %97 : vector<8x32xf32>
    %c0_54 = arith.constant 0 : index
    %c0_55 = arith.constant 0 : index
    %c0_56 = arith.constant 0 : index
    %99 = vector.load %arg14[%c0_54, %c0_55, %c0_56] : memref<2x32x64xf32, #tpu.memory_space<vmem>>, vector<1x32x64xf32>
    %100 = vector.shape_cast %99 : vector<1x32x64xf32> to vector<32x64xf32>
    %cst_57 = arith.constant dense<0.000000e+00> : vector<8x64xf32>
    %101 = tpu.matmul %98, %100, %cst_57 {dimension_numbers = #tpu.dot_dimension_numbers<[1], [0], [0], [1], [0, 0, 1, 1], [], []>} : vector<8x32xf32>, vector<32x64xf32>, vector<8x64xf32> -> vector<8x64xf32>
    %c0_58 = arith.constant 0 : index
    %c0_59 = arith.constant 0 : index
    %c0_60 = arith.constant 0 : index
    %102 = vector.load %arg15[%c0_58, %c0_59, %c0_60] : memref<2x1x64xf32, #tpu.memory_space<vmem>>, vector<1x1x64xf32>
    %103 = vector.shape_cast %102 : vector<1x1x64xf32> to vector<1x64xf32>
    %104 = vector.broadcast %103 : vector<1x64xf32> to vector<8x64xf32>
    %105 = arith.addf %101, %104 : vector<8x64xf32>
    %cst_61 = arith.constant 0.000000e+00 : f32
    %106 = vector.broadcast %cst_61 : f32 to vector<8x64xf32>
    %107 = arith.maximumf %105, %106 : vector<8x64xf32>
    %c0_62 = arith.constant 0 : index
    %c0_63 = arith.constant 0 : index
    %c0_64 = arith.constant 0 : index
    %108 = vector.load %arg16[%c0_62, %c0_63, %c0_64] : memref<2x64x32xf32, #tpu.memory_space<vmem>>, vector<1x64x32xf32>
    %109 = vector.shape_cast %108 : vector<1x64x32xf32> to vector<64x32xf32>
    %cst_65 = arith.constant dense<0.000000e+00> : vector<8x32xf32>
    %110 = tpu.matmul %107, %109, %cst_65 {dimension_numbers = #tpu.dot_dimension_numbers<[1], [0], [0], [1], [0, 0, 1, 1], [], []>} : vector<8x64xf32>, vector<64x32xf32>, vector<8x32xf32> -> vector<8x32xf32>
    %c0_66 = arith.constant 0 : index
    %c0_67 = arith.constant 0 : index
    %c0_68 = arith.constant 0 : index
    %111 = vector.load %arg17[%c0_66, %c0_67, %c0_68] : memref<2x1x32xf32, #tpu.memory_space<vmem>>, vector<1x1x32xf32>
    %112 = vector.shape_cast %111 : vector<1x1x32xf32> to vector<1x32xf32>
    %113 = vector.broadcast %112 : vector<1x32xf32> to vector<8x32xf32>
    %114 = arith.addf %110, %113 : vector<8x32xf32>
    %115 = arith.addf %98, %114 : vector<8x32xf32>
    %c0_69 = arith.constant 0 : index
    %c0_70 = arith.constant 0 : index
    %c0_71 = arith.constant 0 : index
    %116 = vector.load %arg18[%c0_69, %c0_70, %c0_71] : memref<2x1x32xf32, #tpu.memory_space<vmem>>, vector<1x1x32xf32>
    %117 = vector.shape_cast %116 : vector<1x1x32xf32> to vector<1x32xf32>
    %c0_72 = arith.constant 0 : index
    %c0_73 = arith.constant 0 : index
    %c0_74 = arith.constant 0 : index
    %118 = vector.load %arg19[%c0_72, %c0_73, %c0_74] : memref<2x1x32xf32, #tpu.memory_space<vmem>>, vector<1x1x32xf32>
    %119 = vector.shape_cast %118 : vector<1x1x32xf32> to vector<1x32xf32>
    %cst_75 = arith.constant dense<0.000000e+00> : vector<8xf32>
    %120 = vector.multi_reduction <add>, %115, %cst_75 [1] : vector<8x32xf32> to vector<8xf32>
    %121 = vector.shape_cast %120 : vector<8xf32> to vector<8x1xf32>
    %cst_76 = arith.constant 3.200000e+01 : f32
    %122 = vector.broadcast %cst_76 : f32 to vector<8x1xf32>
    %123 = arith.divf %121, %122 : vector<8x1xf32>
    %124 = vector.broadcast %123 : vector<8x1xf32> to vector<8x32xf32>
    %125 = arith.subf %115, %124 : vector<8x32xf32>
    %126 = arith.mulf %125, %125 : vector<8x32xf32>
    %cst_77 = arith.constant dense<0.000000e+00> : vector<8xf32>
    %127 = vector.multi_reduction <add>, %126, %cst_77 [1] : vector<8x32xf32> to vector<8xf32>
    %128 = vector.shape_cast %127 : vector<8xf32> to vector<8x1xf32>
    %cst_78 = arith.constant 3.200000e+01 : f32
    %129 = vector.broadcast %cst_78 : f32 to vector<8x1xf32>
    %130 = arith.divf %128, %129 : vector<8x1xf32>
    %cst_79 = arith.constant 9.99999974E-6 : f32
    %131 = vector.broadcast %cst_79 : f32 to vector<8x1xf32>
    %132 = arith.addf %130, %131 : vector<8x1xf32>
    %133 = math.rsqrt %132 : vector<8x1xf32>
    %134 = vector.broadcast %133 : vector<8x1xf32> to vector<8x32xf32>
    %135 = arith.mulf %125, %134 : vector<8x32xf32>
    %136 = vector.broadcast %117 : vector<1x32xf32> to vector<8x32xf32>
    %137 = arith.mulf %135, %136 : vector<8x32xf32>
    %138 = vector.broadcast %119 : vector<1x32xf32> to vector<8x32xf32>
    %139 = arith.addf %137, %138 : vector<8x32xf32>
    %c1 = arith.constant 1 : index
    %c0_80 = arith.constant 0 : index
    %c0_81 = arith.constant 0 : index
    %140 = vector.load %arg4[%c1, %c0_80, %c0_81] : memref<2x32x32xf32, #tpu.memory_space<vmem>>, vector<1x32x32xf32>
    %141 = vector.shape_cast %140 : vector<1x32x32xf32> to vector<32x32xf32>
    %cst_82 = arith.constant dense<0.000000e+00> : vector<8x32xf32>
    %142 = tpu.matmul %139, %141, %cst_82 {dimension_numbers = #tpu.dot_dimension_numbers<[1], [0], [0], [1], [0, 0, 1, 1], [], []>} : vector<8x32xf32>, vector<32x32xf32>, vector<8x32xf32> -> vector<8x32xf32>
    %c1_83 = arith.constant 1 : index
    %c0_84 = arith.constant 0 : index
    %c0_85 = arith.constant 0 : index
    %143 = vector.load %arg7[%c1_83, %c0_84, %c0_85] : memref<2x1x32xf32, #tpu.memory_space<vmem>>, vector<1x1x32xf32>
    %144 = vector.shape_cast %143 : vector<1x1x32xf32> to vector<1x32xf32>
    %145 = vector.broadcast %144 : vector<1x32xf32> to vector<8x32xf32>
    %146 = arith.addf %142, %145 : vector<8x32xf32>
    %c1_86 = arith.constant 1 : index
    %c0_87 = arith.constant 0 : index
    %c0_88 = arith.constant 0 : index
    %147 = vector.load %arg5[%c1_86, %c0_87, %c0_88] : memref<2x32x32xf32, #tpu.memory_space<vmem>>, vector<1x32x32xf32>
    %148 = vector.shape_cast %147 : vector<1x32x32xf32> to vector<32x32xf32>
    %cst_89 = arith.constant dense<0.000000e+00> : vector<8x32xf32>
    %149 = tpu.matmul %139, %148, %cst_89 {dimension_numbers = #tpu.dot_dimension_numbers<[1], [0], [0], [1], [0, 0, 1, 1], [], []>} : vector<8x32xf32>, vector<32x32xf32>, vector<8x32xf32> -> vector<8x32xf32>
    %c1_90 = arith.constant 1 : index
    %c0_91 = arith.constant 0 : index
    %c0_92 = arith.constant 0 : index
    %150 = vector.load %arg8[%c1_90, %c0_91, %c0_92] : memref<2x1x32xf32, #tpu.memory_space<vmem>>, vector<1x1x32xf32>
    %151 = vector.shape_cast %150 : vector<1x1x32xf32> to vector<1x32xf32>
    %152 = vector.broadcast %151 : vector<1x32xf32> to vector<8x32xf32>
    %153 = arith.addf %149, %152 : vector<8x32xf32>
    %c1_93 = arith.constant 1 : index
    %c0_94 = arith.constant 0 : index
    %c0_95 = arith.constant 0 : index
    %154 = vector.load %arg6[%c1_93, %c0_94, %c0_95] : memref<2x32x32xf32, #tpu.memory_space<vmem>>, vector<1x32x32xf32>
    %155 = vector.shape_cast %154 : vector<1x32x32xf32> to vector<32x32xf32>
    %cst_96 = arith.constant dense<0.000000e+00> : vector<8x32xf32>
    %156 = tpu.matmul %139, %155, %cst_96 {dimension_numbers = #tpu.dot_dimension_numbers<[1], [0], [0], [1], [0, 0, 1, 1], [], []>} : vector<8x32xf32>, vector<32x32xf32>, vector<8x32xf32> -> vector<8x32xf32>
    %c1_97 = arith.constant 1 : index
    %c0_98 = arith.constant 0 : index
    %c0_99 = arith.constant 0 : index
    %157 = vector.load %arg9[%c1_97, %c0_98, %c0_99] : memref<2x1x32xf32, #tpu.memory_space<vmem>>, vector<1x1x32xf32>
    %158 = vector.shape_cast %157 : vector<1x1x32xf32> to vector<1x32xf32>
    %159 = vector.broadcast %158 : vector<1x32xf32> to vector<8x32xf32>
    %160 = arith.addf %156, %159 : vector<8x32xf32>
    %cst_100 = arith.constant 0.000000e+00 : f32
    %161 = vector.broadcast %cst_100 : f32 to vector<8x32xf32>
    %162 = vector.extract_strided_slice %2 {offsets = [0, 0], sizes = [1, 32], strides = [1, 1]} : vector<2x32xf32> to vector<1x32xf32>
    %163 = vector.broadcast %162 : vector<1x32xf32> to vector<8x32xf32>
    %164 = arith.mulf %146, %163 : vector<8x32xf32>
    %cst_101 = arith.constant dense<0.000000e+00> : vector<8x8xf32>
    %165 = tpu.matmul %164, %153, %cst_101 {dimension_numbers = #tpu.dot_dimension_numbers<[1], [1], [0], [0], [0, 0, 1, 0], [], []>} : vector<8x32xf32>, vector<8x32xf32>, vector<8x8xf32> -> vector<8x8xf32>
    %cst_102 = arith.constant 2.500000e-01 : f32
    %166 = vector.broadcast %cst_102 : f32 to vector<8x8xf32>
    %167 = arith.mulf %165, %166 : vector<8x8xf32>
    %168 = arith.addf %167, %1 : vector<8x8xf32>
    %cst_103 = arith.constant dense<0xFF800000> : vector<8xf32>
    %169 = vector.multi_reduction <maximumf>, %168, %cst_103 [1] : vector<8x8xf32> to vector<8xf32>
    %170 = vector.shape_cast %169 : vector<8xf32> to vector<8x1xf32>
    %171 = vector.broadcast %170 : vector<8x1xf32> to vector<8x8xf32>
    %172 = arith.subf %168, %171 : vector<8x8xf32>
    %173 = math.exp %172 : vector<8x8xf32>
    %cst_104 = arith.constant dense<0.000000e+00> : vector<8xf32>
    %174 = vector.multi_reduction <add>, %173, %cst_104 [1] : vector<8x8xf32> to vector<8xf32>
    %175 = vector.shape_cast %174 : vector<8xf32> to vector<8x1xf32>
    %176 = tpu.reciprocal %175 {approx = true} : vector<8x1xf32> -> vector<8x1xf32>
    %177 = vector.broadcast %176 : vector<8x1xf32> to vector<8x8xf32>
    %178 = arith.mulf %173, %177 : vector<8x8xf32>
    %cst_105 = arith.constant dense<0.000000e+00> : vector<8x32xf32>
    %179 = tpu.matmul %178, %160, %cst_105 {dimension_numbers = #tpu.dot_dimension_numbers<[1], [0], [0], [1], [0, 0, 1, 1], [], []>} : vector<8x8xf32>, vector<8x32xf32>, vector<8x32xf32> -> vector<8x32xf32>
    %180 = vector.broadcast %162 : vector<1x32xf32> to vector<8x32xf32>
    %181 = arith.mulf %179, %180 : vector<8x32xf32>
    %182 = arith.addf %161, %181 : vector<8x32xf32>
    %183 = vector.extract_strided_slice %2 {offsets = [1, 0], sizes = [1, 32], strides = [1, 1]} : vector<2x32xf32> to vector<1x32xf32>
    %184 = vector.broadcast %183 : vector<1x32xf32> to vector<8x32xf32>
    %185 = arith.mulf %146, %184 : vector<8x32xf32>
    %cst_106 = arith.constant dense<0.000000e+00> : vector<8x8xf32>
    %186 = tpu.matmul %185, %153, %cst_106 {dimension_numbers = #tpu.dot_dimension_numbers<[1], [1], [0], [0], [0, 0, 1, 0], [], []>} : vector<8x32xf32>, vector<8x32xf32>, vector<8x8xf32> -> vector<8x8xf32>
    %cst_107 = arith.constant 2.500000e-01 : f32
    %187 = vector.broadcast %cst_107 : f32 to vector<8x8xf32>
    %188 = arith.mulf %186, %187 : vector<8x8xf32>
    %189 = arith.addf %188, %1 : vector<8x8xf32>
    %cst_108 = arith.constant dense<0xFF800000> : vector<8xf32>
    %190 = vector.multi_reduction <maximumf>, %189, %cst_108 [1] : vector<8x8xf32> to vector<8xf32>
    %191 = vector.shape_cast %190 : vector<8xf32> to vector<8x1xf32>
    %192 = vector.broadcast %191 : vector<8x1xf32> to vector<8x8xf32>
    %193 = arith.subf %189, %192 : vector<8x8xf32>
    %194 = math.exp %193 : vector<8x8xf32>
    %cst_109 = arith.constant dense<0.000000e+00> : vector<8xf32>
    %195 = vector.multi_reduction <add>, %194, %cst_109 [1] : vector<8x8xf32> to vector<8xf32>
    %196 = vector.shape_cast %195 : vector<8xf32> to vector<8x1xf32>
    %197 = tpu.reciprocal %196 {approx = true} : vector<8x1xf32> -> vector<8x1xf32>
    %198 = vector.broadcast %197 : vector<8x1xf32> to vector<8x8xf32>
    %199 = arith.mulf %194, %198 : vector<8x8xf32>
    %cst_110 = arith.constant dense<0.000000e+00> : vector<8x32xf32>
    %200 = tpu.matmul %199, %160, %cst_110 {dimension_numbers = #tpu.dot_dimension_numbers<[1], [0], [0], [1], [0, 0, 1, 1], [], []>} : vector<8x8xf32>, vector<8x32xf32>, vector<8x32xf32> -> vector<8x32xf32>
    %201 = vector.broadcast %183 : vector<1x32xf32> to vector<8x32xf32>
    %202 = arith.mulf %200, %201 : vector<8x32xf32>
    %203 = arith.addf %182, %202 : vector<8x32xf32>
    %c1_111 = arith.constant 1 : index
    %c0_112 = arith.constant 0 : index
    %c0_113 = arith.constant 0 : index
    %204 = vector.load %arg10[%c1_111, %c0_112, %c0_113] : memref<2x32x32xf32, #tpu.memory_space<vmem>>, vector<1x32x32xf32>
    %205 = vector.shape_cast %204 : vector<1x32x32xf32> to vector<32x32xf32>
    %cst_114 = arith.constant dense<0.000000e+00> : vector<8x32xf32>
    %206 = tpu.matmul %203, %205, %cst_114 {dimension_numbers = #tpu.dot_dimension_numbers<[1], [0], [0], [1], [0, 0, 1, 1], [], []>} : vector<8x32xf32>, vector<32x32xf32>, vector<8x32xf32> -> vector<8x32xf32>
    %c1_115 = arith.constant 1 : index
    %c0_116 = arith.constant 0 : index
    %c0_117 = arith.constant 0 : index
    %207 = vector.load %arg11[%c1_115, %c0_116, %c0_117] : memref<2x1x32xf32, #tpu.memory_space<vmem>>, vector<1x1x32xf32>
    %208 = vector.shape_cast %207 : vector<1x1x32xf32> to vector<1x32xf32>
    %209 = vector.broadcast %208 : vector<1x32xf32> to vector<8x32xf32>
    %210 = arith.addf %206, %209 : vector<8x32xf32>
    %211 = arith.addf %139, %210 : vector<8x32xf32>
    %c1_118 = arith.constant 1 : index
    %c0_119 = arith.constant 0 : index
    %c0_120 = arith.constant 0 : index
    %212 = vector.load %arg12[%c1_118, %c0_119, %c0_120] : memref<2x1x32xf32, #tpu.memory_space<vmem>>, vector<1x1x32xf32>
    %213 = vector.shape_cast %212 : vector<1x1x32xf32> to vector<1x32xf32>
    %c1_121 = arith.constant 1 : index
    %c0_122 = arith.constant 0 : index
    %c0_123 = arith.constant 0 : index
    %214 = vector.load %arg13[%c1_121, %c0_122, %c0_123] : memref<2x1x32xf32, #tpu.memory_space<vmem>>, vector<1x1x32xf32>
    %215 = vector.shape_cast %214 : vector<1x1x32xf32> to vector<1x32xf32>
    %cst_124 = arith.constant dense<0.000000e+00> : vector<8xf32>
    %216 = vector.multi_reduction <add>, %211, %cst_124 [1] : vector<8x32xf32> to vector<8xf32>
    %217 = vector.shape_cast %216 : vector<8xf32> to vector<8x1xf32>
    %cst_125 = arith.constant 3.200000e+01 : f32
    %218 = vector.broadcast %cst_125 : f32 to vector<8x1xf32>
    %219 = arith.divf %217, %218 : vector<8x1xf32>
    %220 = vector.broadcast %219 : vector<8x1xf32> to vector<8x32xf32>
    %221 = arith.subf %211, %220 : vector<8x32xf32>
    %222 = arith.mulf %221, %221 : vector<8x32xf32>
    %cst_126 = arith.constant dense<0.000000e+00> : vector<8xf32>
    %223 = vector.multi_reduction <add>, %222, %cst_126 [1] : vector<8x32xf32> to vector<8xf32>
    %224 = vector.shape_cast %223 : vector<8xf32> to vector<8x1xf32>
    %cst_127 = arith.constant 3.200000e+01 : f32
    %225 = vector.broadcast %cst_127 : f32 to vector<8x1xf32>
    %226 = arith.divf %224, %225 : vector<8x1xf32>
    %cst_128 = arith.constant 9.99999974E-6 : f32
    %227 = vector.broadcast %cst_128 : f32 to vector<8x1xf32>
    %228 = arith.addf %226, %227 : vector<8x1xf32>
    %229 = math.rsqrt %228 : vector<8x1xf32>
    %230 = vector.broadcast %229 : vector<8x1xf32> to vector<8x32xf32>
    %231 = arith.mulf %221, %230 : vector<8x32xf32>
    %232 = vector.broadcast %213 : vector<1x32xf32> to vector<8x32xf32>
    %233 = arith.mulf %231, %232 : vector<8x32xf32>
    %234 = vector.broadcast %215 : vector<1x32xf32> to vector<8x32xf32>
    %235 = arith.addf %233, %234 : vector<8x32xf32>
    %c1_129 = arith.constant 1 : index
    %c0_130 = arith.constant 0 : index
    %c0_131 = arith.constant 0 : index
    %236 = vector.load %arg14[%c1_129, %c0_130, %c0_131] : memref<2x32x64xf32, #tpu.memory_space<vmem>>, vector<1x32x64xf32>
    %237 = vector.shape_cast %236 : vector<1x32x64xf32> to vector<32x64xf32>
    %cst_132 = arith.constant dense<0.000000e+00> : vector<8x64xf32>
    %238 = tpu.matmul %235, %237, %cst_132 {dimension_numbers = #tpu.dot_dimension_numbers<[1], [0], [0], [1], [0, 0, 1, 1], [], []>} : vector<8x32xf32>, vector<32x64xf32>, vector<8x64xf32> -> vector<8x64xf32>
    %c1_133 = arith.constant 1 : index
    %c0_134 = arith.constant 0 : index
    %c0_135 = arith.constant 0 : index
    %239 = vector.load %arg15[%c1_133, %c0_134, %c0_135] : memref<2x1x64xf32, #tpu.memory_space<vmem>>, vector<1x1x64xf32>
    %240 = vector.shape_cast %239 : vector<1x1x64xf32> to vector<1x64xf32>
    %241 = vector.broadcast %240 : vector<1x64xf32> to vector<8x64xf32>
    %242 = arith.addf %238, %241 : vector<8x64xf32>
    %cst_136 = arith.constant 0.000000e+00 : f32
    %243 = vector.broadcast %cst_136 : f32 to vector<8x64xf32>
    %244 = arith.maximumf %242, %243 : vector<8x64xf32>
    %c1_137 = arith.constant 1 : index
    %c0_138 = arith.constant 0 : index
    %c0_139 = arith.constant 0 : index
    %245 = vector.load %arg16[%c1_137, %c0_138, %c0_139] : memref<2x64x32xf32, #tpu.memory_space<vmem>>, vector<1x64x32xf32>
    %246 = vector.shape_cast %245 : vector<1x64x32xf32> to vector<64x32xf32>
    %cst_140 = arith.constant dense<0.000000e+00> : vector<8x32xf32>
    %247 = tpu.matmul %244, %246, %cst_140 {dimension_numbers = #tpu.dot_dimension_numbers<[1], [0], [0], [1], [0, 0, 1, 1], [], []>} : vector<8x64xf32>, vector<64x32xf32>, vector<8x32xf32> -> vector<8x32xf32>
    %c1_141 = arith.constant 1 : index
    %c0_142 = arith.constant 0 : index
    %c0_143 = arith.constant 0 : index
    %248 = vector.load %arg17[%c1_141, %c0_142, %c0_143] : memref<2x1x32xf32, #tpu.memory_space<vmem>>, vector<1x1x32xf32>
    %249 = vector.shape_cast %248 : vector<1x1x32xf32> to vector<1x32xf32>
    %250 = vector.broadcast %249 : vector<1x32xf32> to vector<8x32xf32>
    %251 = arith.addf %247, %250 : vector<8x32xf32>
    %252 = arith.addf %235, %251 : vector<8x32xf32>
    %c1_144 = arith.constant 1 : index
    %c0_145 = arith.constant 0 : index
    %c0_146 = arith.constant 0 : index
    %253 = vector.load %arg18[%c1_144, %c0_145, %c0_146] : memref<2x1x32xf32, #tpu.memory_space<vmem>>, vector<1x1x32xf32>
    %254 = vector.shape_cast %253 : vector<1x1x32xf32> to vector<1x32xf32>
    %c1_147 = arith.constant 1 : index
    %c0_148 = arith.constant 0 : index
    %c0_149 = arith.constant 0 : index
    %255 = vector.load %arg19[%c1_147, %c0_148, %c0_149] : memref<2x1x32xf32, #tpu.memory_space<vmem>>, vector<1x1x32xf32>
    %256 = vector.shape_cast %255 : vector<1x1x32xf32> to vector<1x32xf32>
    %cst_150 = arith.constant dense<0.000000e+00> : vector<8xf32>
    %257 = vector.multi_reduction <add>, %252, %cst_150 [1] : vector<8x32xf32> to vector<8xf32>
    %258 = vector.shape_cast %257 : vector<8xf32> to vector<8x1xf32>
    %cst_151 = arith.constant 3.200000e+01 : f32
    %259 = vector.broadcast %cst_151 : f32 to vector<8x1xf32>
    %260 = arith.divf %258, %259 : vector<8x1xf32>
    %261 = vector.broadcast %260 : vector<8x1xf32> to vector<8x32xf32>
    %262 = arith.subf %252, %261 : vector<8x32xf32>
    %263 = arith.mulf %262, %262 : vector<8x32xf32>
    %cst_152 = arith.constant dense<0.000000e+00> : vector<8xf32>
    %264 = vector.multi_reduction <add>, %263, %cst_152 [1] : vector<8x32xf32> to vector<8xf32>
    %265 = vector.shape_cast %264 : vector<8xf32> to vector<8x1xf32>
    %cst_153 = arith.constant 3.200000e+01 : f32
    %266 = vector.broadcast %cst_153 : f32 to vector<8x1xf32>
    %267 = arith.divf %265, %266 : vector<8x1xf32>
    %cst_154 = arith.constant 9.99999974E-6 : f32
    %268 = vector.broadcast %cst_154 : f32 to vector<8x1xf32>
    %269 = arith.addf %267, %268 : vector<8x1xf32>
    %270 = math.rsqrt %269 : vector<8x1xf32>
    %271 = vector.broadcast %270 : vector<8x1xf32> to vector<8x32xf32>
    %272 = arith.mulf %262, %271 : vector<8x32xf32>
    %273 = vector.broadcast %254 : vector<1x32xf32> to vector<8x32xf32>
    %274 = arith.mulf %272, %273 : vector<8x32xf32>
    %275 = vector.broadcast %256 : vector<1x32xf32> to vector<8x32xf32>
    %276 = arith.addf %274, %275 : vector<8x32xf32>
    %c0_155 = arith.constant 0 : index
    %c0_156 = arith.constant 0 : index
    %277 = vector.load %arg20[%c0_155, %c0_156] : memref<32x128xf32, #tpu.memory_space<vmem>>, vector<32x128xf32>
    %cst_157 = arith.constant dense<0.000000e+00> : vector<8x128xf32>
    %278 = tpu.matmul %276, %277, %cst_157 {dimension_numbers = #tpu.dot_dimension_numbers<[1], [0], [0], [1], [0, 0, 1, 1], [], []>} : vector<8x32xf32>, vector<32x128xf32>, vector<8x128xf32> -> vector<8x128xf32>
    %c0_158 = arith.constant 0 : index
    %c0_159 = arith.constant 0 : index
    %279 = vector.load %arg21[%c0_158, %c0_159] : memref<1x128xf32, #tpu.memory_space<vmem>>, vector<1x128xf32>
    %280 = vector.broadcast %279 : vector<1x128xf32> to vector<8x128xf32>
    %281 = arith.addf %278, %280 : vector<8x128xf32>
    %c0_160 = arith.constant 0 : index
    %c0_161 = arith.constant 0 : index
    %282 = vector.load %arg22[%c0_160, %c0_161] : memref<8x128xf32, #tpu.memory_space<vmem>>, vector<8x128xf32>
    tpu.vector_store %arg22[%c0_160, %c0_161], %281 {strides = array<i32>} : memref<8x128xf32, #tpu.memory_space<vmem>>, vector<8x128xf32>,
    return
  }
  func.func @transform_0(%arg0: i32) -> (i32, i32) {
    %c0_i32 = arith.constant 0 : i32
    %c0_i32_0 = arith.constant 0 : i32
    return %arg0, %c0_i32 : i32, i32
  }
  func.func @transform_1(%arg0: i32) -> (i32, i32) {
    %c0_i32 = arith.constant 0 : i32
    %c0_i32_0 = arith.constant 0 : i32
    %c0_i32_1 = arith.constant 0 : i32
    return %c0_i32, %c0_i32_0 : i32, i32
  }
  func.func @transform_2(%arg0: i32) -> (i32, i32) {
    %c0_i32 = arith.constant 0 : i32
    %c0_i32_0 = arith.constant 0 : i32
    %c0_i32_1 = arith.constant 0 : i32
    return %c0_i32, %c0_i32_0 : i32, i32
  }
  func.func @transform_3(%arg0: i32) -> (i32, i32, i32) {
    %c0_i32 = arith.constant 0 : i32
    %c0_i32_0 = arith.constant 0 : i32
    %c0_i32_1 = arith.constant 0 : i32
    %c0_i32_2 = arith.constant 0 : i32
    return %c0_i32, %c0_i32_0, %c0_i32_1 : i32, i32, i32
  }
  func.func @transform_4(%arg0: i32) -> (i32, i32, i32) {
    %c0_i32 = arith.constant 0 : i32
    %c0_i32_0 = arith.constant 0 : i32
    %c0_i32_1 = arith.constant 0 : i32
    %c0_i32_2 = arith.constant 0 : i32
    return %c0_i32, %c0_i32_0, %c0_i32_1 : i32, i32, i32
  }
  func.func @transform_5(%arg0: i32) -> (i32, i32, i32) {
    %c0_i32 = arith.constant 0 : i32
    %c0_i32_0 = arith.constant 0 : i32
    %c0_i32_1 = arith.constant 0 : i32
    %c0_i32_2 = arith.constant 0 : i32
    return %c0_i32, %c0_i32_0, %c0_i32_1 : i32, i32, i32
  }
  func.func @transform_6(%arg0: i32) -> (i32, i32, i32) {
    %c0_i32 = arith.constant 0 : i32
    %c0_i32_0 = arith.constant 0 : i32
    %c0_i32_1 = arith.constant 0 : i32
    %c0_i32_2 = arith.constant 0 : i32
    return %c0_i32, %c0_i32_0, %c0_i32_1 : i32, i32, i32
  }
  func.func @transform_7(%arg0: i32) -> (i32, i32, i32) {
    %c0_i32 = arith.constant 0 : i32
    %c0_i32_0 = arith.constant 0 : i32
    %c0_i32_1 = arith.constant 0 : i32
    %c0_i32_2 = arith.constant 0 : i32
    return %c0_i32, %c0_i32_0, %c0_i32_1 : i32, i32, i32
  }
  func.func @transform_8(%arg0: i32) -> (i32, i32, i32) {
    %c0_i32 = arith.constant 0 : i32
    %c0_i32_0 = arith.constant 0 : i32
    %c0_i32_1 = arith.constant 0 : i32
    %c0_i32_2 = arith.constant 0 : i32
    return %c0_i32, %c0_i32_0, %c0_i32_1 : i32, i32, i32
  }
  func.func @transform_9(%arg0: i32) -> (i32, i32, i32) {
    %c0_i32 = arith.constant 0 : i32
    %c0_i32_0 = arith.constant 0 : i32
    %c0_i32_1 = arith.constant 0 : i32
    %c0_i32_2 = arith.constant 0 : i32
    return %c0_i32, %c0_i32_0, %c0_i32_1 : i32, i32, i32
  }
  func.func @transform_10(%arg0: i32) -> (i32, i32, i32) {
    %c0_i32 = arith.constant 0 : i32
    %c0_i32_0 = arith.constant 0 : i32
    %c0_i32_1 = arith.constant 0 : i32
    %c0_i32_2 = arith.constant 0 : i32
    return %c0_i32, %c0_i32_0, %c0_i32_1 : i32, i32, i32
  }
  func.func @transform_11(%arg0: i32) -> (i32, i32, i32) {
    %c0_i32 = arith.constant 0 : i32
    %c0_i32_0 = arith.constant 0 : i32
    %c0_i32_1 = arith.constant 0 : i32
    %c0_i32_2 = arith.constant 0 : i32
    return %c0_i32, %c0_i32_0, %c0_i32_1 : i32, i32, i32
  }
  func.func @transform_12(%arg0: i32) -> (i32, i32, i32) {
    %c0_i32 = arith.constant 0 : i32
    %c0_i32_0 = arith.constant 0 : i32
    %c0_i32_1 = arith.constant 0 : i32
    %c0_i32_2 = arith.constant 0 : i32
    return %c0_i32, %c0_i32_0, %c0_i32_1 : i32, i32, i32
  }
  func.func @transform_13(%arg0: i32) -> (i32, i32, i32) {
    %c0_i32 = arith.constant 0 : i32
    %c0_i32_0 = arith.constant 0 : i32
    %c0_i32_1 = arith.constant 0 : i32
    %c0_i32_2 = arith.constant 0 : i32
    return %c0_i32, %c0_i32_0, %c0_i32_1 : i32, i32, i32
  }
  func.func @transform_14(%arg0: i32) -> (i32, i32, i32) {
    %c0_i32 = arith.constant 0 : i32
    %c0_i32_0 = arith.constant 0 : i32
    %c0_i32_1 = arith.constant 0 : i32
    %c0_i32_2 = arith.constant 0 : i32
    return %c0_i32, %c0_i32_0, %c0_i32_1 : i32, i32, i32
  }
  func.func @transform_15(%arg0: i32) -> (i32, i32, i32) {
    %c0_i32 = arith.constant 0 : i32
    %c0_i32_0 = arith.constant 0 : i32
    %c0_i32_1 = arith.constant 0 : i32
    %c0_i32_2 = arith.constant 0 : i32
    return %c0_i32, %c0_i32_0, %c0_i32_1 : i32, i32, i32
  }
  func.func @transform_16(%arg0: i32) -> (i32, i32, i32) {
    %c0_i32 = arith.constant 0 : i32
    %c0_i32_0 = arith.constant 0 : i32
    %c0_i32_1 = arith.constant 0 : i32
    %c0_i32_2 = arith.constant 0 : i32
    return %c0_i32, %c0_i32_0, %c0_i32_1 : i32, i32, i32
  }
  func.func @transform_17(%arg0: i32) -> (i32, i32, i32) {
    %c0_i32 = arith.constant 0 : i32
    %c0_i32_0 = arith.constant 0 : i32
    %c0_i32_1 = arith.constant 0 : i32
    %c0_i32_2 = arith.constant 0 : i32
    return %c0_i32, %c0_i32_0, %c0_i32_1 : i32, i32, i32
  }
  func.func @transform_18(%arg0: i32) -> (i32, i32, i32) {
    %c0_i32 = arith.constant 0 : i32
    %c0_i32_0 = arith.constant 0 : i32
    %c0_i32_1 = arith.constant 0 : i32
    %c0_i32_2 = arith.constant 0 : i32
    return %c0_i32, %c0_i32_0, %c0_i32_1 : i32, i32, i32
  }
  func.func @transform_19(%arg0: i32) -> (i32, i32) {
    %c0_i32 = arith.constant 0 : i32
    %c0_i32_0 = arith.constant 0 : i32
    %c0_i32_1 = arith.constant 0 : i32
    return %c0_i32, %c0_i32_0 : i32, i32
  }
  func.func @transform_20(%arg0: i32) -> (i32, i32) {
    %c0_i32 = arith.constant 0 : i32
    %c0_i32_0 = arith.constant 0 : i32
    %c0_i32_1 = arith.constant 0 : i32
    return %c0_i32, %c0_i32_0 : i32, i32
  }
  func.func @transform_21(%arg0: i32) -> (i32, i32) {
    %c0_i32 = arith.constant 0 : i32
    %c0_i32_0 = arith.constant 0 : i32
    return %arg0, %c0_i32 : i32, i32
  }
}

</mosaic_0001>

<llo_original>
// kernel: transformer_forward.1
$region0: #{transformer_forward.1}
  #allocation0 [shape = 'u32[]', space=smem, size = 0x4, offset = 0x4, fixed_abs, tag = 'smem constant byte address 0x4 - core index']
  #allocation1 [shape = 'u32[72,128]{1,0:T(1,128)}', space=vmem, size = 0x9000, scoped, tag = 'internal scratch']
  %s0 = inlined_call_operand.vmem [shape: f32[16,32], index: 0, kind: input, shape index: {}]
  %s1 = inlined_call_operand.vmem [shape: f32[8,8], index: 1, kind: input, shape index: {}]
  %s2 = inlined_call_operand.vmem [shape: f32[2,32], index: 2, kind: input, shape index: {}]
  %s3 = inlined_call_operand.vmem [shape: f32[2,32,32], index: 3, kind: input, shape index: {}]
  %s4 = inlined_call_operand.vmem [shape: f32[2,32,32], index: 4, kind: input, shape index: {}]
  %s5 = inlined_call_operand.vmem [shape: f32[2,32,32], index: 5, kind: input, shape index: {}]
  %s6 = inlined_call_operand.vmem [shape: f32[2,1,32], index: 6, kind: input, shape index: {}]
  %s7 = inlined_call_operand.vmem [shape: f32[2,1,32], index: 7, kind: input, shape index: {}]
  %s8 = inlined_call_operand.vmem [shape: f32[2,1,32], index: 8, kind: input, shape index: {}]
  %s9 = inlined_call_operand.hbm [shape: f32[2,32,32], index: 9, kind: input, shape index: {}]
  %s10 = inlined_call_operand.vmem [shape: f32[2,1,32], index: 10, kind: input, shape index: {}]
  %s11 = inlined_call_operand.vmem [shape: f32[2,1,32], index: 11, kind: input, shape index: {}]
  %s12 = inlined_call_operand.vmem [shape: f32[2,1,32], index: 12, kind: input, shape index: {}]
  %s13 = inlined_call_operand.hbm [shape: f32[2,32,64], index: 13, kind: input, shape index: {}]
  %s14 = inlined_call_operand.hbm [shape: f32[2,1,64], index: 14, kind: input, shape index: {}]
  %s15 = inlined_call_operand.vmem [shape: f32[2,64,32], index: 15, kind: input, shape index: {}]
  %s16 = inlined_call_operand.hbm [shape: f32[2,1,32], index: 16, kind: input, shape index: {}]
  %s17 = inlined_call_operand.vmem [shape: f32[2,1,32], index: 17, kind: input, shape index: {}]
  %s18 = inlined_call_operand.vmem [shape: f32[2,1,32], index: 18, kind: input, shape index: {}]
  %s19 = inlined_call_operand.vmem [shape: f32[32,128], index: 19, kind: input, shape index: {}]
  %s20 = inlined_call_operand.vmem [shape: f32[1,128], index: 20, kind: input, shape index: {}]
  %s21 = inlined_call_operand.hbm [shape: f32[16,128], index: 21, kind: output, shape index: {}]
  %s22 = sld [smem:[#allocation0]]
  $region133: #{transformer_forward.1} parent=0
    _
  %s24 = ssub.s32 1, %s22
  %s25 = scalar_select 0, %s24, %s22
  $region1: #{transformer_forward.1} parent=0
    #allocation2 [shape = 'u8[32768]{0}', space=vmem, size = 0x8000, scoped, tag = 'input window, operand 9, single buffered']
    #allocation3 [shape = 's32[2]{0}', space=sflag, size = 0x8, scoped, tag = 'scoped memory for transformer_forward.1']
    #allocation4 [shape = 's32[2]{0}', space=sflag, size = 0x8, scoped, tag = 'scoped memory for transformer_forward.1']
    #allocation5 [shape = 'u8[32768]{0}', space=vmem, size = 0x8000, scoped, tag = 'input window, operand 13, single buffered']
    #allocation6 [shape = 's32[1]{0}', space=sflag, size = 0x4, scoped, tag = 'scoped memory for transformer_forward.1']
    #allocation7 [shape = 'u8[1024]{0}', space=vmem, size = 0x400, scoped, tag = 'input window, operand 14, single buffered']
    #allocation8 [shape = 'u8[1024]{0}', space=vmem, size = 0x400, scoped, tag = 'input window, operand 16, single buffered']
    #allocation9 [shape = 's32[1]{0}', space=sflag, size = 0x4, scoped, tag = 'scoped memory for transformer_forward.1']
    #allocation10 [shape = 'u8[8192]{0}', space=vmem, size = 0x2000, scoped, tag = 'output window, operand 0']
    %26 = vsyncpa [#allocation3], 0
    %27 = vsyncpa [#allocation6], 0
    %28 = vsyncpa [#allocation9], 0
    %29 = vsyncpa [#allocation4], 0
    %s30 = scalar_lea.sflag [#allocation4], 1
    %31 = vsyncpa %s30, 0
    loop: start=0, step=1, limit=4
    $region2: #{transformer_forward.1} parent=1 // loop_pre_header
      _
    $region3: #{transformer_forward.1} parent=1 // loop_header
      %s33 = sphi 0, %s37
      %p34 = scmp.ge.s32.totalorder %s33, 4
      %s43 = sphi 0, %s45
      %s46 = sphi 0, %s43
      %s47 = sphi 0, %s46
      %s63 = sphi 0, %s47
      %s67 = sphi 0, %s67
      %s69 = sphi 0, %s67
      %s70 = sphi 0, %s69
      %s84 = sphi 0, %s70
      %s88 = sphi 0, %s88
      %s90 = sphi 0, %s88
      %s91 = sphi 0, %s90
      %s105 = sphi 0, %s91
      %s109 = sphi 0, %s109
      %s111 = sphi 0, %s109
      %s112 = sphi 0, %s111
      %s126 = sphi 0, %s112
      %s130 = sphi 0, %s130
      %s132 = sphi 0, %s130
      %s133 = sphi 0, %s132
      %s147 = sphi 0, %s133
      %s151 = sphi 0, %s151
      %s153 = sphi 0, %s151
      %s154 = sphi 0, %s153
      %s168 = sphi 0, %s154
      %s172 = sphi 0, %s172
      %s174 = sphi 0, %s172
      %s175 = sphi 0, %s174
      %s189 = sphi 0, %s175
      %s193 = sphi 0, %s193
      %s195 = sphi 0, %s193
      %s196 = sphi 0, %s195
      %s210 = sphi 0, %s196
      %s214 = sphi 0, %s214
      %s216 = sphi 0, %s214
      %s217 = sphi 0, %s216
      %s231 = sphi 0, %s217
      %s235 = sphi 0, %s235
      %s237 = sphi 0, %s235
      %s238 = sphi 0, %s237
      %s252 = sphi 0, %s238
      %s256 = sphi 0, %s256
      %s258 = sphi 0, %s256
      %s259 = sphi 0, %s258
      %s273 = sphi 0, %s259
      %s277 = sphi 0, %s277
      %s279 = sphi 0, %s277
      %s280 = sphi 0, %s279
      %s294 = sphi 0, %s280
      %s298 = sphi 0, %s298
      %s300 = sphi 0, %s298
      %s301 = sphi 0, %s300
      %s315 = sphi 0, %s301
      %s319 = sphi 0, %s319
      %s321 = sphi 0, %s319
      %s322 = sphi 0, %s321
      %s336 = sphi 0, %s322
      %s340 = sphi 0, %s340
      %s342 = sphi 0, %s340
      %s343 = sphi 0, %s342
      %s357 = sphi 0, %s343
      %s361 = sphi 0, %s361
      %s363 = sphi 0, %s361
      %s364 = sphi 0, %s363
      %s378 = sphi 0, %s364
      %s382 = sphi 0, %s382
      %s384 = sphi 0, %s382
      %s385 = sphi 0, %s384
      %s399 = sphi 0, %s385
      %s403 = sphi 0, %s403
      %s405 = sphi 0, %s403
      %s406 = sphi 0, %s405
      %s420 = sphi 0, %s406
      %s424 = sphi 0, %s424
      %s426 = sphi 0, %s424
      %s427 = sphi 0, %s426
      %s441 = sphi 0, %s427
      %s445 = sphi 0, %s445
      %s447 = sphi 0, %s445
      %s448 = sphi 0, %s447
      %s462 = sphi 0, %s448
      %s466 = sphi 0, %s466
      %s468 = sphi 0, %s466
      %s469 = sphi 0, %s468
      %s483 = sphi 0, %s469
      %s489 = sphi 0, %s491
      %s492 = sphi 0, %s489
      %s493 = sphi 0, %s492
      %s509 = sphi 0, %s493
    $region4: #{transformer_forward.1} parent=1 // loop_header_branch
      %36 = sbr.rel (%p34) target = $region8
    $region5: #{transformer_forward.1} parent=1 // loop_body
      %s38 = ssub.s32 %s33, 1
      %s39 = ssub.s32 %s33, 2
      %s40 = sadd.s32 %s33, 1
      %s41 = ssub.s32 %s33, %s40
      %p42 = scmp.eq.s32.totalorder %s41, 0
      %s44 = sadd.s32 %s43, 1
      %s45 = scalar_select %p42, %s43, %s44
      %p48 = pneg %p42
      %p49 = scmp.eq.s32.totalorder %s33, 1
      %p50 = por %p48, %p49
      %p51 = scmp.ne.s32.totalorder %s43, %s46
      %p52 = scmp.eq.s32.totalorder %s33, 0
      %p53 = por %p51, %p52
      %p54 = scmp.ne.s32.totalorder %s43, %s46
      %p55 = scmp.eq.s32.totalorder %s38, 1
      %p56 = por %p54, %p55
      %p57 = scmp.ne.s32.totalorder %s46, %s47
      %p58 = scmp.eq.s32.totalorder %s38, 0
      %p59 = por %p57, %p58
      %p60 = scmp.ne.s32.totalorder %s46, %s47
      %p61 = scmp.eq.s32.totalorder %s39, 1
      %p62 = por %p60, %p61
      %p64 = scmp.ne.s32.totalorder %s47, %s63
      %p65 = scmp.eq.s32.totalorder %s39, 0
      %p66 = por %p64, %p65
      %s68 = sadd.s32 %s67, 1
      %p71 = scmp.eq.s32.totalorder %s33, 1
      %p72 = scmp.ne.s32.totalorder %s67, %s69
      %p73 = scmp.eq.s32.totalorder %s33, 0
      %p74 = por %p72, %p73
      %p75 = scmp.ne.s32.totalorder %s67, %s69
      %p76 = scmp.eq.s32.totalorder %s38, 1
      %p77 = por %p75, %p76
      %p78 = scmp.ne.s32.totalorder %s69, %s70
      %p79 = scmp.eq.s32.totalorder %s38, 0
      %p80 = por %p78, %p79
      %p81 = scmp.ne.s32.totalorder %s69, %s70
      %p82 = scmp.eq.s32.totalorder %s39, 1
      %p83 = por %p81, %p82
      %p85 = scmp.ne.s32.totalorder %s70, %s84
      %p86 = scmp.eq.s32.totalorder %s39, 0
      %p87 = por %p85, %p86
      %s89 = sadd.s32 %s88, 1
      %p92 = scmp.eq.s32.totalorder %s33, 1
      %p93 = scmp.ne.s32.totalorder %s88, %s90
      %p94 = scmp.eq.s32.totalorder %s33, 0
      %p95 = por %p93, %p94
      %p96 = scmp.ne.s32.totalorder %s88, %s90
      %p97 = scmp.eq.s32.totalorder %s38, 1
      %p98 = por %p96, %p97
      %p99 = scmp.ne.s32.totalorder %s90, %s91
      %p100 = scmp.eq.s32.totalorder %s38, 0
      %p101 = por %p99, %p100
      %p102 = scmp.ne.s32.totalorder %s90, %s91
      %p103 = scmp.eq.s32.totalorder %s39, 1
      %p104 = por %p102, %p103
      %p106 = scmp.ne.s32.totalorder %s91, %s105
      %p107 = scmp.eq.s32.totalorder %s39, 0
      %p108 = por %p106, %p107
      %s110 = sadd.s32 %s109, 1
      %p113 = scmp.eq.s32.totalorder %s33, 1
      %p114 = scmp.ne.s32.totalorder %s109, %s111
      %p115 = scmp.eq.s32.totalorder %s33, 0
      %p116 = por %p114, %p115
      %p117 = scmp.ne.s32.totalorder %s109, %s111
      %p118 = scmp.eq.s32.totalorder %s38, 1
      %p119 = por %p117, %p118
      %p120 = scmp.ne.s32.totalorder %s111, %s112
      %p121 = scmp.eq.s32.totalorder %s38, 0
      %p122 = por %p120, %p121
      %p123 = scmp.ne.s32.totalorder %s111, %s112
      %p124 = scmp.eq.s32.totalorder %s39, 1
      %p125 = por %p123, %p124
      %p127 = scmp.ne.s32.totalorder %s112, %s126
      %p128 = scmp.eq.s32.totalorder %s39, 0
      %p129 = por %p127, %p128
      %s131 = sadd.s32 %s130, 1
      %p134 = scmp.eq.s32.totalorder %s33, 1
      %p135 = scmp.ne.s32.totalorder %s130, %s132
      %p136 = scmp.eq.s32.totalorder %s33, 0
      %p137 = por %p135, %p136
      %p138 = scmp.ne.s32.totalorder %s130, %s132
      %p139 = scmp.eq.s32.totalorder %s38, 1
      %p140 = por %p138, %p139
      %p141 = scmp.ne.s32.totalorder %s132, %s133
      %p142 = scmp.eq.s32.totalorder %s38, 0
      %p143 = por %p141, %p142
      %p144 = scmp.ne.s32.totalorder %s132, %s133
      %p145 = scmp.eq.s32.totalorder %s39, 1
      %p146 = por %p144, %p145
      %p148 = scmp.ne.s32.totalorder %s133, %s147
      %p149 = scmp.eq.s32.totalorder %s39, 0
      %p150 = por %p148, %p149
      %s152 = sadd.s32 %s151, 1
      %p155 = scmp.eq.s32.totalorder %s33, 1
      %p156 = scmp.ne.s32.totalorder %s151, %s153
      %p157 = scmp.eq.s32.totalorder %s33, 0
      %p158 = por %p156, %p157
      %p159 = scmp.ne.s32.totalorder %s151, %s153
      %p160 = scmp.eq.s32.totalorder %s38, 1
      %p161 = por %p159, %p160
      %p162 = scmp.ne.s32.totalorder %s153, %s154
      %p163 = scmp.eq.s32.totalorder %s38, 0
      %p164 = por %p162, %p163
      %p165 = scmp.ne.s32.totalorder %s153, %s154
      %p166 = scmp.eq.s32.totalorder %s39, 1
      %p167 = por %p165, %p166
      %p169 = scmp.ne.s32.totalorder %s154, %s168
      %p170 = scmp.eq.s32.totalorder %s39, 0
      %p171 = por %p169, %p170
      %s173 = sadd.s32 %s172, 1
      %p176 = scmp.eq.s32.totalorder %s33, 1
      %p177 = scmp.ne.s32.totalorder %s172, %s174
      %p178 = scmp.eq.s32.totalorder %s33, 0
      %p179 = por %p177, %p178
      %p180 = scmp.ne.s32.totalorder %s172, %s174
      %p181 = scmp.eq.s32.totalorder %s38, 1
      %p182 = por %p180, %p181
      %p183 = scmp.ne.s32.totalorder %s174, %s175
      %p184 = scmp.eq.s32.totalorder %s38, 0
      %p185 = por %p183, %p184
      %p186 = scmp.ne.s32.totalorder %s174, %s175
      %p187 = scmp.eq.s32.totalorder %s39, 1
      %p188 = por %p186, %p187
      %p190 = scmp.ne.s32.totalorder %s175, %s189
      %p191 = scmp.eq.s32.totalorder %s39, 0
      %p192 = por %p190, %p191
      %s194 = sadd.s32 %s193, 1
      %p197 = scmp.eq.s32.totalorder %s33, 1
      %p198 = scmp.ne.s32.totalorder %s193, %s195
      %p199 = scmp.eq.s32.totalorder %s33, 0
      %p200 = por %p198, %p199
      %p201 = scmp.ne.s32.totalorder %s193, %s195
      %p202 = scmp.eq.s32.totalorder %s38, 1
      %p203 = por %p201, %p202
      %p204 = scmp.ne.s32.totalorder %s195, %s196
      %p205 = scmp.eq.s32.totalorder %s38, 0
      %p206 = por %p204, %p205
      %p207 = scmp.ne.s32.totalorder %s195, %s196
      %p208 = scmp.eq.s32.totalorder %s39, 1
      %p209 = por %p207, %p208
      %p211 = scmp.ne.s32.totalorder %s196, %s210
      %p212 = scmp.eq.s32.totalorder %s39, 0
      %p213 = por %p211, %p212
      %s215 = sadd.s32 %s214, 1
      %p218 = scmp.eq.s32.totalorder %s33, 1
      %p219 = scmp.ne.s32.totalorder %s214, %s216
      %p220 = scmp.eq.s32.totalorder %s33, 0
      %p221 = por %p219, %p220
      %p222 = scmp.ne.s32.totalorder %s214, %s216
      %p223 = scmp.eq.s32.totalorder %s38, 1
      %p224 = por %p222, %p223
      %p225 = scmp.ne.s32.totalorder %s216, %s217
      %p226 = scmp.eq.s32.totalorder %s38, 0
      %p227 = por %p225, %p226
      %p228 = scmp.ne.s32.totalorder %s216, %s217
      %p229 = scmp.eq.s32.totalorder %s39, 1
      %p230 = por %p228, %p229
      %p232 = scmp.ne.s32.totalorder %s217, %s231
      %p233 = scmp.eq.s32.totalorder %s39, 0
      %p234 = por %p232, %p233
      %s236 = sadd.s32 %s235, 1
      %p239 = scmp.eq.s32.totalorder %s33, 1
      %p240 = scmp.ne.s32.totalorder %s235, %s237
      %p241 = scmp.eq.s32.totalorder %s33, 0
      %p242 = por %p240, %p241
      %p243 = scmp.ne.s32.totalorder %s235, %s237
      %p244 = scmp.eq.s32.totalorder %s38, 1
      %p245 = por %p243, %p244
      %p246 = scmp.ne.s32.totalorder %s237, %s238
      %p247 = scmp.eq.s32.totalorder %s38, 0
      %p248 = por %p246, %p247
      %p249 = scmp.ne.s32.totalorder %s237, %s238
      %p250 = scmp.eq.s32.totalorder %s39, 1
      %p251 = por %p249, %p250
      %p253 = scmp.ne.s32.totalorder %s238, %s252
      %p254 = scmp.eq.s32.totalorder %s39, 0
      %p255 = por %p253, %p254
      %s257 = sadd.s32 %s256, 1
      %p260 = scmp.eq.s32.totalorder %s33, 1
      %p261 = scmp.ne.s32.totalorder %s256, %s258
      %p262 = scmp.eq.s32.totalorder %s33, 0
      %p263 = por %p261, %p262
      %p264 = scmp.ne.s32.totalorder %s256, %s258
      %p265 = scmp.eq.s32.totalorder %s38, 1
      %p266 = por %p264, %p265
      %p267 = scmp.ne.s32.totalorder %s258, %s259
      %p268 = scmp.eq.s32.totalorder %s38, 0
      %p269 = por %p267, %p268
      %p270 = scmp.ne.s32.totalorder %s258, %s259
      %p271 = scmp.eq.s32.totalorder %s39, 1
      %p272 = por %p270, %p271
      %p274 = scmp.ne.s32.totalorder %s259, %s273
      %p275 = scmp.eq.s32.totalorder %s39, 0
      %p276 = por %p274, %p275
      %s278 = sadd.s32 %s277, 1
      %p281 = scmp.eq.s32.totalorder %s33, 1
      %p282 = scmp.ne.s32.totalorder %s277, %s279
      %p283 = scmp.eq.s32.totalorder %s33, 0
      %p284 = por %p282, %p283
      %p285 = scmp.ne.s32.totalorder %s277, %s279
      %p286 = scmp.eq.s32.totalorder %s38, 1
      %p287 = por %p285, %p286
      %p288 = scmp.ne.s32.totalorder %s279, %s280
      %p289 = scmp.eq.s32.totalorder %s38, 0
      %p290 = por %p288, %p289
      %p291 = scmp.ne.s32.totalorder %s279, %s280
      %p292 = scmp.eq.s32.totalorder %s39, 1
      %p293 = por %p291, %p292
      %p295 = scmp.ne.s32.totalorder %s280, %s294
      %p296 = scmp.eq.s32.totalorder %s39, 0
      %p297 = por %p295, %p296
      %s299 = sadd.s32 %s298, 1
      %p302 = scmp.eq.s32.totalorder %s33, 1
      %p303 = scmp.ne.s32.totalorder %s298, %s300
      %p304 = scmp.eq.s32.totalorder %s33, 0
      %p305 = por %p303, %p304
      %p306 = scmp.ne.s32.totalorder %s298, %s300
      %p307 = scmp.eq.s32.totalorder %s38, 1
      %p308 = por %p306, %p307
      %p309 = scmp.ne.s32.totalorder %s300, %s301
      %p310 = scmp.eq.s32.totalorder %s38, 0
      %p311 = por %p309, %p310
      %p312 = scmp.ne.s32.totalorder %s300, %s301
      %p313 = scmp.eq.s32.totalorder %s39, 1
      %p314 = por %p312, %p313
      %p316 = scmp.ne.s32.totalorder %s301, %s315
      %p317 = scmp.eq.s32.totalorder %s39, 0
      %p318 = por %p316, %p317
      %s320 = sadd.s32 %s319, 1
      %p323 = scmp.eq.s32.totalorder %s33, 1
      %p324 = scmp.ne.s32.totalorder %s319, %s321
      %p325 = scmp.eq.s32.totalorder %s33, 0
      %p326 = por %p324, %p325
      %p327 = scmp.ne.s32.totalorder %s319, %s321
      %p328 = scmp.eq.s32.totalorder %s38, 1
      %p329 = por %p327, %p328
      %p330 = scmp.ne.s32.totalorder %s321, %s322
      %p331 = scmp.eq.s32.totalorder %s38, 0
      %p332 = por %p330, %p331
      %p333 = scmp.ne.s32.totalorder %s321, %s322
      %p334 = scmp.eq.s32.totalorder %s39, 1
      %p335 = por %p333, %p334
      %p337 = scmp.ne.s32.totalorder %s322, %s336
      %p338 = scmp.eq.s32.totalorder %s39, 0
      %p339 = por %p337, %p338
      %s341 = sadd.s32 %s340, 1
      %p344 = scmp.eq.s32.totalorder %s33, 1
      %p345 = scmp.ne.s32.totalorder %s340, %s342
      %p346 = scmp.eq.s32.totalorder %s33, 0
      %p347 = por %p345, %p346
      %p348 = scmp.ne.s32.totalorder %s340, %s342
      %p349 = scmp.eq.s32.totalorder %s38, 1
      %p350 = por %p348, %p349
      %p351 = scmp.ne.s32.totalorder %s342, %s343
      %p352 = scmp.eq.s32.totalorder %s38, 0
      %p353 = por %p351, %p352
      %p354 = scmp.ne.s32.totalorder %s342, %s343
      %p355 = scmp.eq.s32.totalorder %s39, 1
      %p356 = por %p354, %p355
      %p358 = scmp.ne.s32.totalorder %s343, %s357
      %p359 = scmp.eq.s32.totalorder %s39, 0
      %p360 = por %p358, %p359
      %s362 = sadd.s32 %s361, 1
      %p365 = scmp.eq.s32.totalorder %s33, 1
      %p366 = scmp.ne.s32.totalorder %s361, %s363
      %p367 = scmp.eq.s32.totalorder %s33, 0
      %p368 = por %p366, %p367
      %p369 = scmp.ne.s32.totalorder %s361, %s363
      %p370 = scmp.eq.s32.totalorder %s38, 1
      %p371 = por %p369, %p370
      %p372 = scmp.ne.s32.totalorder %s363, %s364
      %p373 = scmp.eq.s32.totalorder %s38, 0
      %p374 = por %p372, %p373
      %p375 = scmp.ne.s32.totalorder %s363, %s364
      %p376 = scmp.eq.s32.totalorder %s39, 1
      %p377 = por %p375, %p376
      %p379 = scmp.ne.s32.totalorder %s364, %s378
      %p380 = scmp.eq.s32.totalorder %s39, 0
      %p381 = por %p379, %p380
      %s383 = sadd.s32 %s382, 1
      %p386 = scmp.eq.s32.totalorder %s33, 1
      %p387 = scmp.ne.s32.totalorder %s382, %s384
      %p388 = scmp.eq.s32.totalorder %s33, 0
      %p389 = por %p387, %p388
      %p390 = scmp.ne.s32.totalorder %s382, %s384
      %p391 = scmp.eq.s32.totalorder %s38, 1
      %p392 = por %p390, %p391
      %p393 = scmp.ne.s32.totalorder %s384, %s385
      %p394 = scmp.eq.s32.totalorder %s38, 0
      %p395 = por %p393, %p394
      %p396 = scmp.ne.s32.totalorder %s384, %s385
      %p397 = scmp.eq.s32.totalorder %s39, 1
      %p398 = por %p396, %p397
      %p400 = scmp.ne.s32.totalorder %s385, %s399
      %p401 = scmp.eq.s32.totalorder %s39, 0
      %p402 = por %p400, %p401
      %s404 = sadd.s32 %s403, 1
      %p407 = scmp.eq.s32.totalorder %s33, 1
      %p408 = scmp.ne.s32.totalorder %s403, %s405
      %p409 = scmp.eq.s32.totalorder %s33, 0
      %p410 = por %p408, %p409
      %p411 = scmp.ne.s32.totalorder %s403, %s405
      %p412 = scmp.eq.s32.totalorder %s38, 1
      %p413 = por %p411, %p412
      %p414 = scmp.ne.s32.totalorder %s405, %s406
      %p415 = scmp.eq.s32.totalorder %s38, 0
      %p416 = por %p414, %p415
      %p417 = scmp.ne.s32.totalorder %s405, %s406
      %p418 = scmp.eq.s32.totalorder %s39, 1
      %p419 = por %p417, %p418
      %p421 = scmp.ne.s32.totalorder %s406, %s420
      %p422 = scmp.eq.s32.totalorder %s39, 0
      %p423 = por %p421, %p422
      %s425 = sadd.s32 %s424, 1
      %p428 = scmp.eq.s32.totalorder %s33, 1
      %p429 = scmp.ne.s32.totalorder %s424, %s426
      %p430 = scmp.eq.s32.totalorder %s33, 0
      %p431 = por %p429, %p430
      %p432 = scmp.ne.s32.totalorder %s424, %s426
      %p433 = scmp.eq.s32.totalorder %s38, 1
      %p434 = por %p432, %p433
      %p435 = scmp.ne.s32.totalorder %s426, %s427
      %p436 = scmp.eq.s32.totalorder %s38, 0
      %p437 = por %p435, %p436
      %p438 = scmp.ne.s32.totalorder %s426, %s427
      %p439 = scmp.eq.s32.totalorder %s39, 1
      %p440 = por %p438, %p439
      %p442 = scmp.ne.s32.totalorder %s427, %s441
      %p443 = scmp.eq.s32.totalorder %s39, 0
      %p444 = por %p442, %p443
      %s446 = sadd.s32 %s445, 1
      %p449 = scmp.eq.s32.totalorder %s33, 1
      %p450 = scmp.ne.s32.totalorder %s445, %s447
      %p451 = scmp.eq.s32.totalorder %s33, 0
      %p452 = por %p450, %p451
      %p453 = scmp.ne.s32.totalorder %s445, %s447
      %p454 = scmp.eq.s32.totalorder %s38, 1
      %p455 = por %p453, %p454
      %p456 = scmp.ne.s32.totalorder %s447, %s448
      %p457 = scmp.eq.s32.totalorder %s38, 0
      %p458 = por %p456, %p457
      %p459 = scmp.ne.s32.totalorder %s447, %s448
      %p460 = scmp.eq.s32.totalorder %s39, 1
      %p461 = por %p459, %p460
      %p463 = scmp.ne.s32.totalorder %s448, %s462
      %p464 = scmp.eq.s32.totalorder %s39, 0
      %p465 = por %p463, %p464
      %s467 = sadd.s32 %s466, 1
      %p470 = scmp.eq.s32.totalorder %s33, 1
      %p471 = scmp.ne.s32.totalorder %s466, %s468
      %p472 = scmp.eq.s32.totalorder %s33, 0
      %p473 = por %p471, %p472
      %p474 = scmp.ne.s32.totalorder %s466, %s468
      %p475 = scmp.eq.s32.totalorder %s38, 1
      %p476 = por %p474, %p475
      %p477 = scmp.ne.s32.totalorder %s468, %s469
      %p478 = scmp.eq.s32.totalorder %s38, 0
      %p479 = por %p477, %p478
      %p480 = scmp.ne.s32.totalorder %s468, %s469
      %p481 = scmp.eq.s32.totalorder %s39, 1
      %p482 = por %p480, %p481
      %p484 = scmp.ne.s32.totalorder %s469, %s483
      %p485 = scmp.eq.s32.totalorder %s39, 0
      %p486 = por %p484, %p485
      %s487 = ssub.s32 %s33, %s40
      %p488 = scmp.eq.s32.totalorder %s487, 0
      %s490 = sadd.s32 %s489, 1
      %s491 = scalar_select %p488, %s489, %s490
      %p494 = pneg %p488
      %p495 = scmp.eq.s32.totalorder %s33, 1
      %p496 = por %p494, %p495
      %p497 = scmp.ne.s32.totalorder %s489, %s492
      %p498 = scmp.eq.s32.totalorder %s33, 0
      %p499 = por %p497, %p498
      %p500 = scmp.ne.s32.totalorder %s489, %s492
      %p501 = scmp.eq.s32.totalorder %s38, 1
      %p502 = por %p500, %p501
      %p503 = scmp.ne.s32.totalorder %s492, %s493
      %p504 = scmp.eq.s32.totalorder %s38, 0
      %p505 = por %p503, %p504
      %p506 = scmp.ne.s32.totalorder %s492, %s493
      %p507 = scmp.eq.s32.totalorder %s39, 1
      %p508 = por %p506, %p507
      %p510 = scmp.ne.s32.totalorder %s493, %s509
      %p511 = scmp.eq.s32.totalorder %s39, 0
      %p512 = por %p510, %p511
      %p513 = scmp.le.s32.totalorder 1, %s33
      %p514 = scmp.lt.s32.totalorder %s33, 3
      %p515 = pnand %p513, %p514
      %p516 = pneg %p515
      // Predicated region
      $region9: #{transformer_forward.1} parent=5 // pred_check
        _
      $region10: #{transformer_forward.1} parent=5 // pred_check_branch
        %518 = sbr.rel (%p515) target = $region12
      $region11: #{transformer_forward.1} parent=5 // pred_region
        %s519 = ssub.s32 %s33, 1
        // Predicated region
        $region13: #{transformer_forward.1} parent=11 // pred_check
          %p520 = pneg %p80
        $region14: #{transformer_forward.1} parent=11 // pred_check_branch
          %522 = sbr.rel (%p520) target = $region16
        $region15: #{transformer_forward.1} parent=11 // pred_region
          _
        $region16: #{transformer_forward.1} parent=11 // pred_fallthru
          _
        // Predicated region
        $region17: #{transformer_forward.1} parent=11 // pred_check
          %p523 = pneg %p101
        $region18: #{transformer_forward.1} parent=11 // pred_check_branch
          %525 = sbr.rel (%p523) target = $region20
        $region19: #{transformer_forward.1} parent=11 // pred_region
          _
        $region20: #{transformer_forward.1} parent=11 // pred_fallthru
          _
        // Predicated region
        $region21: #{transformer_forward.1} parent=11 // pred_check
          %p526 = pneg %p122
        $region22: #{transformer_forward.1} parent=11 // pred_check_branch
          %528 = sbr.rel (%p526) target = $region24
        $region23: #{transformer_forward.1} parent=11 // pred_region
          _
        $region24: #{transformer_forward.1} parent=11 // pred_fallthru
          _
        // Predicated region
        $region25: #{transformer_forward.1} parent=11 // pred_check
          %p529 = pneg %p143
        $region26: #{transformer_forward.1} parent=11 // pred_check_branch
          %531 = sbr.rel (%p529) target = $region28
        $region27: #{transformer_forward.1} parent=11 // pred_region
          _
        $region28: #{transformer_forward.1} parent=11 // pred_fallthru
          _
        // Predicated region
        $region29: #{transformer_forward.1} parent=11 // pred_check
          %p532 = pneg %p164
        $region30: #{transformer_forward.1} parent=11 // pred_check_branch
          %534 = sbr.rel (%p532) target = $region32
        $region31: #{transformer_forward.1} parent=11 // pred_region
          _
        $region32: #{transformer_forward.1} parent=11 // pred_fallthru
          _
        // Predicated region
        $region33: #{transformer_forward.1} parent=11 // pred_check
          %p535 = pneg %p185
        $region34: #{transformer_forward.1} parent=11 // pred_check_branch
          %537 = sbr.rel (%p535) target = $region36
        $region35: #{transformer_forward.1} parent=11 // pred_region
          _
        $region36: #{transformer_forward.1} parent=11 // pred_fallthru
          _
        // Predicated region
        $region37: #{transformer_forward.1} parent=11 // pred_check
          %p538 = pneg %p206
        $region38: #{transformer_forward.1} parent=11 // pred_check_branch
          %540 = sbr.rel (%p538) target = $region40
        $region39: #{transformer_forward.1} parent=11 // pred_region
          _
        $region40: #{transformer_forward.1} parent=11 // pred_fallthru
          _
        // Predicated region
        $region41: #{transformer_forward.1} parent=11 // pred_check
          %p541 = pneg %p227
        $region42: #{transformer_forward.1} parent=11 // pred_check_branch
          %543 = sbr.rel (%p541) target = $region44
        $region43: #{transformer_forward.1} parent=11 // pred_region
          _
        $region44: #{transformer_forward.1} parent=11 // pred_fallthru
          _
        // Predicated region
        $region45: #{transformer_forward.1} parent=11 // pred_check
          %p544 = pneg %p248
        $region46: #{transformer_forward.1} parent=11 // pred_check_branch
          %546 = sbr.rel (%p544) target = $region48
        $region47: #{transformer_forward.1} parent=11 // pred_region
          %548 = vsyncadd [#allocation3], 0
          %s549 = sshll.u32 %s9, 4
          %s550 = int_to_ptr.hbm [resolvable:$true] %s549
          %s551 = sshll.u32 [#allocation2], 4
          %s552 = int_to_ptr.vmem [resolvable:$true] %s551
          %557 = dma.hbm_to_vmem [thread:$0]  %s550, 1024, %s552, [#allocation3], 128, 128, 8
        $region48: #{transformer_forward.1} parent=11 // pred_fallthru
          _
        // Predicated region
        $region49: #{transformer_forward.1} parent=11 // pred_check
          %p558 = pneg %p269
        $region50: #{transformer_forward.1} parent=11 // pred_check_branch
          %560 = sbr.rel (%p558) target = $region52
        $region51: #{transformer_forward.1} parent=11 // pred_region
          _
        $region52: #{transformer_forward.1} parent=11 // pred_fallthru
          _
        // Predicated region
        $region53: #{transformer_forward.1} parent=11 // pred_check
          %p561 = pneg %p290
        $region54: #{transformer_forward.1} parent=11 // pred_check_branch
          %563 = sbr.rel (%p561) target = $region56
        $region55: #{transformer_forward.1} parent=11 // pred_region
          _
        $region56: #{transformer_forward.1} parent=11 // pred_fallthru
          _
        // Predicated region
        $region57: #{transformer_forward.1} parent=11 // pred_check
          %p564 = pneg %p311
        $region58: #{transformer_forward.1} parent=11 // pred_check_branch
          %566 = sbr.rel (%p564) target = $region60
        $region59: #{transformer_forward.1} parent=11 // pred_region
          _
        $region60: #{transformer_forward.1} parent=11 // pred_fallthru
          _
        // Predicated region
        $region61: #{transformer_forward.1} parent=11 // pred_check
          %p567 = pneg %p332
        $region62: #{transformer_forward.1} parent=11 // pred_check_branch
          %569 = sbr.rel (%p567) target = $region64
        $region63: #{transformer_forward.1} parent=11 // pred_region
          %571 = vsyncadd [#allocation6], 0
          %s572 = sshll.u32 %s13, 4
          %s573 = int_to_ptr.hbm [resolvable:$true] %s572
          %s574 = sshll.u32 [#allocation5], 4
          %s575 = int_to_ptr.vmem [resolvable:$true] %s574
          %580 = dma.hbm_to_vmem [thread:$0]  %s573, 1024, %s575, [#allocation6], 128, 128, 8
        $region64: #{transformer_forward.1} parent=11 // pred_fallthru
          _
        // Predicated region
        $region65: #{transformer_forward.1} parent=11 // pred_check
          %p581 = pneg %p353
        $region66: #{transformer_forward.1} parent=11 // pred_check_branch
          %583 = sbr.rel (%p581) target = $region68
        $region67: #{transformer_forward.1} parent=11 // pred_region
          %585 = vsyncadd [#allocation6], 0
          %s586 = sshll.u32 %s14, 4
          %s587 = int_to_ptr.hbm [resolvable:$true] %s586
          %s588 = sshll.u32 [#allocation7], 4
          %s589 = int_to_ptr.vmem [resolvable:$true] %s588
          %594 = dma.hbm_to_vmem [thread:$0]  %s587, 32, %s589, [#allocation6], 16, 16, 1
        $region68: #{transformer_forward.1} parent=11 // pred_fallthru
          _
        // Predicated region
        $region69: #{transformer_forward.1} parent=11 // pred_check
          %p595 = pneg %p374
        $region70: #{transformer_forward.1} parent=11 // pred_check_branch
          %597 = sbr.rel (%p595) target = $region72
        $region71: #{transformer_forward.1} parent=11 // pred_region
          _
        $region72: #{transformer_forward.1} parent=11 // pred_fallthru
          _
        // Predicated region
        $region73: #{transformer_forward.1} parent=11 // pred_check
          %p598 = pneg %p395
        $region74: #{transformer_forward.1} parent=11 // pred_check_branch
          %600 = sbr.rel (%p598) target = $region76
        $region75: #{transformer_forward.1} parent=11 // pred_region
          %602 = vsyncadd [#allocation9], 0
          %s603 = sshll.u32 %s16, 4
          %s604 = int_to_ptr.hbm [resolvable:$true] %s603
          %s605 = sshll.u32 [#allocation8], 4
          %s606 = int_to_ptr.vmem [resolvable:$true] %s605
          %611 = dma.hbm_to_vmem [thread:$0]  %s604, 32, %s606, [#allocation9], 16, 16, 1
        $region76: #{transformer_forward.1} parent=11 // pred_fallthru
          _
        // Predicated region
        $region77: #{transformer_forward.1} parent=11 // pred_check
          %p612 = pneg %p416
        $region78: #{transformer_forward.1} parent=11 // pred_check_branch
          %614 = sbr.rel (%p612) target = $region80
        $region79: #{transformer_forward.1} parent=11 // pred_region
          _
        $region80: #{transformer_forward.1} parent=11 // pred_fallthru
          _
        // Predicated region
        $region81: #{transformer_forward.1} parent=11 // pred_check
          %p615 = pneg %p437
        $region82: #{transformer_forward.1} parent=11 // pred_check_branch
          %617 = sbr.rel (%p615) target = $region84
        $region83: #{transformer_forward.1} parent=11 // pred_region
          _
        $region84: #{transformer_forward.1} parent=11 // pred_fallthru
          _
        // Predicated region
        $region85: #{transformer_forward.1} parent=11 // pred_check
          %p618 = pneg %p458
        $region86: #{transformer_forward.1} parent=11 // pred_check_branch
          %620 = sbr.rel (%p618) target = $region88
        $region87: #{transformer_forward.1} parent=11 // pred_region
          _
        $region88: #{transformer_forward.1} parent=11 // pred_fallthru
          _
        // Predicated region
        $region89: #{transformer_forward.1} parent=11 // pred_check
          %p621 = pneg %p479
        $region90: #{transformer_forward.1} parent=11 // pred_check_branch
          %623 = sbr.rel (%p621) target = $region92
        $region91: #{transformer_forward.1} parent=11 // pred_region
          _
        $region92: #{transformer_forward.1} parent=11 // pred_fallthru
          _
      $region12: #{transformer_forward.1} parent=5 // pred_fallthru
        _
      %p624 = scmp.lt.s32.totalorder %s33, 2
      // Predicated region
      $region93: #{transformer_forward.1} parent=5 // pred_check
        %p625 = pneg %p624
      $region94: #{transformer_forward.1} parent=5 // pred_check_branch
        %627 = sbr.rel (%p625) target = $region96
      $region95: #{transformer_forward.1} parent=5 // pred_region
        // Predicated region
        $region97: #{transformer_forward.1} parent=95 // pred_check
          %p628 = pneg %p53
        $region98: #{transformer_forward.1} parent=95 // pred_check_branch
          %630 = sbr.rel (%p628) target = $region100
        $region99: #{transformer_forward.1} parent=95 // pred_region
          %p631 = scmp.lt.s32.totalorder %s33, 1
          %s632 = scalar_select %p631, %s33, 1
          %s633 = smul.addr %s632, 8
          %s634 = scalar_lea.vmem %s0, %s633
        $region100: #{transformer_forward.1} parent=95 // pred_fallthru
          _
      $region96: #{transformer_forward.1} parent=5 // pred_fallthru
        _
      %p635 = scmp.le.s32.totalorder 1, %s33
      %p636 = scmp.lt.s32.totalorder %s33, 3
      %p637 = pnand %p635, %p636
      %p638 = pneg %p637
      // Predicated region
      $region101: #{transformer_forward.1} parent=5 // pred_check
        _
      $region102: #{transformer_forward.1} parent=5 // pred_check_branch
        %640 = sbr.rel (%p637) target = $region104
      $region103: #{transformer_forward.1} parent=5 // pred_region
        %s641 = ssub.s32 %s33, 1
        // Predicated region
        $region105: #{transformer_forward.1} parent=103 // pred_check
          %p642 = pneg %p248
        $region106: #{transformer_forward.1} parent=103 // pred_check_branch
          %644 = sbr.rel (%p642) target = $region108
        $region107: #{transformer_forward.1} parent=103 // pred_region
          %646 = dma.done [#allocation3], 1024
        $region108: #{transformer_forward.1} parent=103 // pred_fallthru
          _
        // Predicated region
        $region109: #{transformer_forward.1} parent=103 // pred_check
          %p647 = pneg %p332
        $region110: #{transformer_forward.1} parent=103 // pred_check_branch
          %649 = sbr.rel (%p647) target = $region112
        $region111: #{transformer_forward.1} parent=103 // pred_region
          %651 = dma.done [#allocation6], 1024
        $region112: #{transformer_forward.1} parent=103 // pred_fallthru
          _
        // Predicated region
        $region113: #{transformer_forward.1} parent=103 // pred_check
          %p652 = pneg %p353
        $region114: #{transformer_forward.1} parent=103 // pred_check_branch
          %654 = sbr.rel (%p652) target = $region116
        $region115: #{transformer_forward.1} parent=103 // pred_region
          %656 = dma.done [#allocation6], 32
        $region116: #{transformer_forward.1} parent=103 // pred_fallthru
          _
        // Predicated region
        $region117: #{transformer_forward.1} parent=103 // pred_check
          %p657 = pneg %p395
        $region118: #{transformer_forward.1} parent=103 // pred_check_branch
          %659 = sbr.rel (%p657) target = $region120
        $region119: #{transformer_forward.1} parent=103 // pred_region
          %661 = dma.done [#allocation9], 32
        $region120: #{transformer_forward.1} parent=103 // pred_fallthru
          _
        %p662 = scmp.lt.s32.totalorder %s38, 1
        %s663 = scalar_select %p662, %s38, 1
        %s664 = smul.addr %s663, 8
        %s665 = scalar_lea.vmem %s0, %s664
        %p666 = pneg %p59
        %p667 = pneg %p56
        %p668 = pneg %p80
        %p669 = pneg %p77
        %p670 = pneg %p101
        %p671 = pneg %p98
        %p672 = pneg %p122
        %p673 = pneg %p119
        %p674 = pneg %p143
        %p675 = pneg %p140
        %p676 = pneg %p164
        %p677 = pneg %p161
        %p678 = pneg %p185
        %p679 = pneg %p182
        %p680 = pneg %p206
        %p681 = pneg %p203
        %p682 = pneg %p227
        %p683 = pneg %p224
        %p684 = pneg %p248
        %p685 = pneg %p245
        %p686 = pneg %p269
        %p687 = pneg %p266
        %p688 = pneg %p290
        %p689 = pneg %p287
        %p690 = pneg %p311
        %p691 = pneg %p308
        %p692 = pneg %p332
        %p693 = pneg %p329
        %p694 = pneg %p353
        %p695 = pneg %p350
        %p696 = pneg %p374
        %p697 = pneg %p371
        %p698 = pneg %p395
        %p699 = pneg %p392
        %p700 = pneg %p416
        %p701 = pneg %p413
        %p702 = pneg %p437
        %p703 = pneg %p434
        %p704 = pneg %p458
        %p705 = pneg %p455
        %p706 = pneg %p479
        %p707 = pneg %p476
        %p708 = pneg %p505
        %p709 = pneg %p502
        %s710 = sand.u32 %s492, 1
        %s711 = scalar_lea.sflag [#allocation4], %s710
        %s712 = sand.u32 %s492, 1
        %s713 = smul.addr %s712, 8
        %s714 = scalar_lea.vmem [#allocation10], %s713
        %p715 = scmp.lt.s32.totalorder %s38, 1
        %s716 = scalar_select %p715, %s38, 1
        %s717 = smul.addr %s716, 8
        %s718 = scalar_lea.vmem %s0, %s717
        %v719 = vld [vmem:[%s718] sm:$0xff]
        %v720 = vld [vmem:[%s1] sm:$0xff]
        %v721 = vld [vmem:[%s2] sm:$0x3]
        %v722 = vld [vmem:[%s3] sm:$0xff]
        %v723 = vld [vmem:[%s3 + $0x8] sm:$0xff]
        %v724 = vld [vmem:[%s3 + $0x10] sm:$0xff]
        %v725 = vld [vmem:[%s3 + $0x18] sm:$0xff]
        %v726 = vld [vmem:[%s6] sm:$0x1]
        %v728 = vperm.slane %v726, 0
        %vm730 = vcmask 261120
        %v732 = vsel %vm730, %v719, 0
        %734 = vmatpush.msra.mxu0 0.0
        %735 = vmatpush.msra.mxu0 0.0
        %736 = vmatpush.msra.mxu0 0.0
        %737 = vmatpush.msra.mxu0 0.0
        %738 = vmatpush.msra.mxu0 0.0
        %739 = vmatpush.msra.mxu0 0.0
        %740 = vmatpush.msra.mxu0 0.0
        %741 = vmatpush.msra.mxu0 0.0
        %742 = vmatpush.msra.mxu0 0.0
        %743 = vmatpush.msra.mxu0 0.0
        %744 = vmatpush.msra.mxu0 0.0
        %745 = vmatpush.msra.mxu0 0.0
        %746 = vmatpush.msra.mxu0 %v725
        %747 = vmatpush.msra.mxu0 %v724
        %748 = vmatpush.msra.mxu0 %v723
        %749 = vmatpush.msra.mxu0 %v722
        %750 = vmatmul.f32.gmra.mxu0 %v732
        %v751 = vpop.f32.mrf.mxu0
        %v752 = vadd.f32 %v728, %v751
        %753 = vdwg.mxu0
        %v754 = vld [vmem:[%s4] sm:$0xff]
        %v755 = vld [vmem:[%s4 + $0x8] sm:$0xff]
        %v756 = vld [vmem:[%s4 + $0x10] sm:$0xff]
        %v757 = vld [vmem:[%s4 + $0x18] sm:$0xff]
        %v758 = vld [vmem:[%s7] sm:$0x1]
        %v760 = vperm.slane %v758, 0
        %762 = vmatpush.msra.mxu0 0.0
        %763 = vmatpush.msra.mxu0 0.0
        %764 = vmatpush.msra.mxu0 0.0
        %765 = vmatpush.msra.mxu0 0.0
        %766 = vmatpush.msra.mxu0 0.0
        %767 = vmatpush.msra.mxu0 0.0
        %768 = vmatpush.msra.mxu0 0.0
        %769 = vmatpush.msra.mxu0 0.0
        %770 = vmatpush.msra.mxu0 0.0
        %771 = vmatpush.msra.mxu0 0.0
        %772 = vmatpush.msra.mxu0 0.0
        %773 = vmatpush.msra.mxu0 0.0
        %774 = vmatpush.msra.mxu0 %v757
        %775 = vmatpush.msra.mxu0 %v756
        %776 = vmatpush.msra.mxu0 %v755
        %777 = vmatpush.msra.mxu0 %v754
        %778 = vmatmul.f32.gmra.mxu0 %v732
        %v779 = vpop.f32.mrf.mxu0
        %v780 = vadd.f32 %v760, %v779
        %781 = vdwg.mxu0
        %v782 = vld [vmem:[%s5] sm:$0xff]
        %v783 = vld [vmem:[%s5 + $0x8] sm:$0xff]
        %v784 = vld [vmem:[%s5 + $0x10] sm:$0xff]
        %v785 = vld [vmem:[%s5 + $0x18] sm:$0xff]
        %v786 = vld [vmem:[%s8] sm:$0x1]
        %v788 = vperm.slane %v786, 0
        %790 = vmatpush.msra.mxu0 0.0
        %791 = vmatpush.msra.mxu0 0.0
        %792 = vmatpush.msra.mxu0 0.0
        %793 = vmatpush.msra.mxu0 0.0
        %794 = vmatpush.msra.mxu0 0.0
        %795 = vmatpush.msra.mxu0 0.0
        %796 = vmatpush.msra.mxu0 0.0
        %797 = vmatpush.msra.mxu0 0.0
        %798 = vmatpush.msra.mxu0 0.0
        %799 = vmatpush.msra.mxu0 0.0
        %800 = vmatpush.msra.mxu0 0.0
        %801 = vmatpush.msra.mxu0 0.0
        %802 = vmatpush.msra.mxu0 %v785
        %803 = vmatpush.msra.mxu0 %v784
        %804 = vmatpush.msra.mxu0 %v783
        %805 = vmatpush.msra.mxu0 %v782
        %806 = vmatmul.f32.gmra.mxu0 %v732
        %v807 = vpop.f32.mrf.mxu0
        %v808 = vadd.f32 %v788, %v807
        %809 = vdwg.mxu0
        %v810 = vperm.slane %v721, 0
        %v811 = vmul.f32 %v752, %v810
        %v813 = vsel %vm730, %v811, 0
        %v816 = vsel %vm730, %v780, 0
        %818 = vmatpush.xpose.msra.mxu0 0.0
        %819 = vmatpush.xpose.msra.mxu0 0.0
        %820 = vmatpush.xpose.msra.mxu0 0.0
        %821 = vmatpush.xpose.msra.mxu0 0.0
        %822 = vmatpush.xpose.msra.mxu0 0.0
        %823 = vmatpush.xpose.msra.mxu0 0.0
        %824 = vmatpush.xpose.msra.mxu0 0.0
        %825 = vmatpush.xpose.msra.mxu0 0.0
        %826 = vmatpush.xpose.msra.mxu0 0.0
        %827 = vmatpush.xpose.msra.mxu0 0.0
        %828 = vmatpush.xpose.msra.mxu0 0.0
        %829 = vmatpush.xpose.msra.mxu0 0.0
        %830 = vmatpush.xpose.msra.mxu0 0.0
        %831 = vmatpush.xpose.msra.mxu0 0.0
        %832 = vmatpush.xpose.msra.mxu0 0.0
        %833 = vmatpush.xpose.msra.mxu0 %v816
        %834 = vmatmul.f32.gmra.mxu0 %v813
        %v835 = vpop.f32.mrf.mxu0
        %v836 = vadd.f32 0.0, %v835
        %837 = vdwg.mxu0
        %v838 = vmul.f32 %v836, 0.25
        %v839 = vadd.f32 %v838, %v720
        %vm840 = vcmask 64512
        %v841 = vsel %vm840, %v839, -inf
        %842 = vmax.xlane.f32.xlu0 %v841
        %v843 = vpop.xlane.xlu0 %842
        %v844 = vsub.f32 %v839, %v843
        %v845 = vmul.f32 %v844, 1.442695
        %v846 = vpow.pop %v845
        %v847 = vsel %vm840, %v846, 0.0
        %848 = vadd.xlane.f32.xlu0 %v847
        %v849 = vpop.xlane.xlu0 %848
        %v850 = vrcp.pop %v849
        %v851 = vmul.f32 %v846, %v850
        %v853 = vsel %vm840, %v851, 0
        %855 = vmatpush.msra.mxu0 0.0
        %856 = vmatpush.msra.mxu0 0.0
        %857 = vmatpush.msra.mxu0 0.0
        %858 = vmatpush.msra.mxu0 0.0
        %859 = vmatpush.msra.mxu0 0.0
        %860 = vmatpush.msra.mxu0 0.0
        %861 = vmatpush.msra.mxu0 0.0
        %862 = vmatpush.msra.mxu0 0.0
        %863 = vmatpush.msra.mxu0 0.0
        %864 = vmatpush.msra.mxu0 0.0
        %865 = vmatpush.msra.mxu0 0.0
        %866 = vmatpush.msra.mxu0 0.0
        %867 = vmatpush.msra.mxu0 0.0
        %868 = vmatpush.msra.mxu0 0.0
        %869 = vmatpush.msra.mxu0 0.0
        %870 = vmatpush.msra.mxu0 %v808
        %871 = vmatmul.f32.gmra.mxu0 %v853
        %v872 = vpop.f32.mrf.mxu0
        %v873 = vadd.f32 0.0, %v872
        %874 = vdwg.mxu0
        %v875 = vmul.f32 %v873, %v810
        %v876 = vadd.f32 %v875, 0.0
        %v877 = vperm.slane %v721, 1
        %v878 = vmul.f32 %v752, %v877
        %v880 = vsel %vm730, %v878, 0
        %882 = vmatpush.xpose.msra.mxu0 0.0
        %883 = vmatpush.xpose.msra.mxu0 0.0
        %884 = vmatpush.xpose.msra.mxu0 0.0
        %885 = vmatpush.xpose.msra.mxu0 0.0
        %886 = vmatpush.xpose.msra.mxu0 0.0
        %887 = vmatpush.xpose.msra.mxu0 0.0
        %888 = vmatpush.xpose.msra.mxu0 0.0
        %889 = vmatpush.xpose.msra.mxu0 0.0
        %890 = vmatpush.xpose.msra.mxu0 0.0
        %891 = vmatpush.xpose.msra.mxu0 0.0
        %892 = vmatpush.xpose.msra.mxu0 0.0
        %893 = vmatpush.xpose.msra.mxu0 0.0
        %894 = vmatpush.xpose.msra.mxu0 0.0
        %895 = vmatpush.xpose.msra.mxu0 0.0
        %896 = vmatpush.xpose.msra.mxu0 0.0
        %897 = vmatpush.xpose.msra.mxu0 %v816
        %898 = vmatmul.f32.gmra.mxu0 %v880
        %v899 = vpop.f32.mrf.mxu0
        %v900 = vadd.f32 0.0, %v899
        %901 = vdwg.mxu0
        %v902 = vmul.f32 %v900, 0.25
        %v903 = vadd.f32 %v902, %v720
        %v904 = vsel %vm840, %v903, -inf
        %905 = vmax.xlane.f32.xlu0 %v904
        %v906 = vpop.xlane.xlu0 %905
        %v907 = vsub.f32 %v903, %v906
        %v908 = vmul.f32 %v907, 1.442695
        %v909 = vpow.pop %v908
        %v910 = vsel %vm840, %v909, 0.0
        %911 = vadd.xlane.f32.xlu0 %v910
        %v912 = vpop.xlane.xlu0 %911
        %v913 = vrcp.pop %v912
        %v914 = vmul.f32 %v909, %v913
        %v916 = vsel %vm840, %v914, 0
        %918 = vmatpush.msra.mxu0 0.0
        %919 = vmatpush.msra.mxu0 0.0
        %920 = vmatpush.msra.mxu0 0.0
        %921 = vmatpush.msra.mxu0 0.0
        %922 = vmatpush.msra.mxu0 0.0
        %923 = vmatpush.msra.mxu0 0.0
        %924 = vmatpush.msra.mxu0 0.0
        %925 = vmatpush.msra.mxu0 0.0
        %926 = vmatpush.msra.mxu0 0.0
        %927 = vmatpush.msra.mxu0 0.0
        %928 = vmatpush.msra.mxu0 0.0
        %929 = vmatpush.msra.mxu0 0.0
        %930 = vmatpush.msra.mxu0 0.0
        %931 = vmatpush.msra.mxu0 0.0
        %932 = vmatpush.msra.mxu0 0.0
        %933 = vmatpush.msra.mxu0 %v808
        %934 = vmatmul.f32.gmra.mxu0 %v916
        %v935 = vpop.f32.mrf.mxu0
        %v936 = vadd.f32 0.0, %v935
        %937 = vdwg.mxu0
        %v938 = vmul.f32 %v936, %v877
        %v939 = vadd.f32 %v876, %v938
        %v940 = vld [vmem:[#allocation2] sm:$0xff]
        %v941 = vld [vmem:[#allocation2 + $0x8] sm:$0xff]
        %v942 = vld [vmem:[#allocation2 + $0x10] sm:$0xff]
        %v943 = vld [vmem:[#allocation2 + $0x18] sm:$0xff]
        %v944 = vld [vmem:[%s10] sm:$0x1]
        %v946 = vperm.slane %v944, 0
        %v949 = vsel %vm730, %v939, 0
        %951 = vmatpush.msra.mxu0 0.0
        %952 = vmatpush.msra.mxu0 0.0
        %953 = vmatpush.msra.mxu0 0.0
        %954 = vmatpush.msra.mxu0 0.0
        %955 = vmatpush.msra.mxu0 0.0
        %956 = vmatpush.msra.mxu0 0.0
        %957 = vmatpush.msra.mxu0 0.0
        %958 = vmatpush.msra.mxu0 0.0
        %959 = vmatpush.msra.mxu0 0.0
        %960 = vmatpush.msra.mxu0 0.0
        %961 = vmatpush.msra.mxu0 0.0
        %962 = vmatpush.msra.mxu0 0.0
        %963 = vmatpush.msra.mxu0 %v943
        %964 = vmatpush.msra.mxu0 %v942
        %965 = vmatpush.msra.mxu0 %v941
        %966 = vmatpush.msra.mxu0 %v940
        %967 = vmatmul.f32.gmra.mxu0 %v949
        %v968 = vpop.f32.mrf.mxu0
        %v969 = vadd.f32 %v946, %v968
        %970 = vdwg.mxu0
        %v971 = vadd.f32 %v719, %v969
        %v972 = vld [vmem:[%s11] sm:$0x1]
        %v973 = vld [vmem:[%s12] sm:$0x1]
        %v974 = vsel %vm730, %v971, 0.0
        %975 = vadd.xlane.f32.xlu0 %v974
        %v976 = vpop.xlane.xlu0 %975
        %v977 = vrcp.pop 32.0
        %v978 = vmul.f32 32.0, %v977
        %v979 = vsub.f32 1.0, %v978
        %v980 = vmul.f32 %v977, %v979
        %v981 = vadd.f32 %v977, %v980
        %vm982 = vweird.f32 %v977
        %v983 = vsel %vm982, %v977, %v981
        %v984 = vmul.f32 %v976, %v983
        %v985 = vsub.f32 %v971, %v984
        %v986 = vmul.f32 %v985, %v985
        %v987 = vsel %vm730, %v986, 0.0
        %988 = vadd.xlane.f32.xlu0 %v987
        %v989 = vpop.xlane.xlu0 %988
        %v990 = vmul.f32 %v989, %v983
        %v991 = vadd.f32 %v990, 1e-05
        %v992 = vrsqrt.pop %v991
        %v993 = vmul.f32 %v992, %v991
        %v994 = vmul.f32 %v993, %v992
        %v995 = vmul.f32 0.5, %v994
        %v996 = vsub.f32 1.5, %v995
        %v997 = vmul.f32 %v992, %v996
        %vm998 = vweird.f32 %v991
        %vm999 = vweird.f32 %v992
        %vm1000 = vmor %vm998, %vm999
        %v1001 = vsel %vm1000, %v992, %v997
        %v1002 = vmul.f32 %v985, %v1001
        %v1004 = vperm.slane %v972, 0
        %v1006 = vmul.f32 %v1002, %v1004
        %v1008 = vperm.slane %v973, 0
        %v1010 = vadd.f32 %v1006, %v1008
        %v1011 = vld [vmem:[#allocation5] sm:$0xff]
        %v1012 = vld [vmem:[#allocation5 + $0x8] sm:$0xff]
        %v1013 = vld [vmem:[#allocation5 + $0x10] sm:$0xff]
        %v1014 = vld [vmem:[#allocation5 + $0x18] sm:$0xff]
        %v1015 = vld [vmem:[#allocation7] sm:$0x1]
        %v1017 = vperm.slane %v1015, 0
        %v1020 = vsel %vm730, %v1010, 0
        %1022 = vmatpush.msra.mxu0 0.0
        %1023 = vmatpush.msra.mxu0 0.0
        %1024 = vmatpush.msra.mxu0 0.0
        %1025 = vmatpush.msra.mxu0 0.0
        %1026 = vmatpush.msra.mxu0 0.0
        %1027 = vmatpush.msra.mxu0 0.0
        %1028 = vmatpush.msra.mxu0 0.0
        %1029 = vmatpush.msra.mxu0 0.0
        %1030 = vmatpush.msra.mxu0 0.0
        %1031 = vmatpush.msra.mxu0 0.0
        %1032 = vmatpush.msra.mxu0 0.0
        %1033 = vmatpush.msra.mxu0 0.0
        %1034 = vmatpush.msra.mxu0 %v1014
        %1035 = vmatpush.msra.mxu0 %v1013
        %1036 = vmatpush.msra.mxu0 %v1012
        %1037 = vmatpush.msra.mxu0 %v1011
        %1038 = vmatmul.f32.gmra.mxu0 %v1020
        %v1039 = vpop.f32.mrf.mxu0
        %v1040 = vadd.f32 %v1017, %v1039
        %1041 = vdwg.mxu0
        %v1042 = vmax.f32 %v1040, 0.0
        %v1043 = vld [vmem:[%s15] sm:$0xff]
        %v1044 = vld [vmem:[%s15 + $0x8] sm:$0xff]
        %v1045 = vld [vmem:[%s15 + $0x10] sm:$0xff]
        %v1046 = vld [vmem:[%s15 + $0x18] sm:$0xff]
        %v1047 = vld [vmem:[%s15 + $0x20] sm:$0xff]
        %v1048 = vld [vmem:[%s15 + $0x28] sm:$0xff]
        %v1049 = vld [vmem:[%s15 + $0x30] sm:$0xff]
        %v1050 = vld [vmem:[%s15 + $0x38] sm:$0xff]
        %v1051 = vld [vmem:[#allocation8] sm:$0x1]
        %v1053 = vperm.slane %v1051, 0
        %vm1055 = vcmask 523264
        %v1057 = vsel %vm1055, %v1042, 0
        %1059 = vmatpush.msra.mxu0 0.0
        %1060 = vmatpush.msra.mxu0 0.0
        %1061 = vmatpush.msra.mxu0 0.0
        %1062 = vmatpush.msra.mxu0 0.0
        %1063 = vmatpush.msra.mxu0 0.0
        %1064 = vmatpush.msra.mxu0 0.0
        %1065 = vmatpush.msra.mxu0 0.0
        %1066 = vmatpush.msra.mxu0 0.0
        %1067 = vmatpush.msra.mxu0 %v1050
        %1068 = vmatpush.msra.mxu0 %v1049
        %1069 = vmatpush.msra.mxu0 %v1048
        %1070 = vmatpush.msra.mxu0 %v1047
        %1071 = vmatpush.msra.mxu0 %v1046
        %1072 = vmatpush.msra.mxu0 %v1045
        %1073 = vmatpush.msra.mxu0 %v1044
        %1074 = vmatpush.msra.mxu0 %v1043
        %1075 = vmatmul.f32.gmra.mxu0 %v1057
        %v1076 = vpop.f32.mrf.mxu0
        %v1077 = vadd.f32 %v1053, %v1076
        %1078 = vdwg.mxu0
        %v1079 = vadd.f32 %v1010, %v1077
        %v1080 = vld [vmem:[%s17] sm:$0x1]
        %v1081 = vld [vmem:[%s18] sm:$0x1]
        %v1082 = vsel %vm730, %v1079, 0.0
        %1083 = vadd.xlane.f32.xlu0 %v1082
        %v1084 = vpop.xlane.xlu0 %1083
        %v1085 = vmul.f32 %v1084, %v983
        %v1086 = vsub.f32 %v1079, %v1085
        %v1087 = vmul.f32 %v1086, %v1086
        %v1088 = vsel %vm730, %v1087, 0.0
        %1089 = vadd.xlane.f32.xlu0 %v1088
        %v1090 = vpop.xlane.xlu0 %1089
        %v1091 = vmul.f32 %v1090, %v983
        %v1092 = vadd.f32 %v1091, 1e-05
        %v1093 = vrsqrt.pop %v1092
        %v1094 = vmul.f32 %v1093, %v1092
        %v1095 = vmul.f32 %v1094, %v1093
        %v1096 = vmul.f32 0.5, %v1095
        %v1097 = vsub.f32 1.5, %v1096
        %v1098 = vmul.f32 %v1093, %v1097
        %vm1099 = vweird.f32 %v1092
        %vm1100 = vweird.f32 %v1093
        %vm1101 = vmor %vm1099, %vm1100
        %v1102 = vsel %vm1101, %v1093, %v1098
        %v1103 = vmul.f32 %v1086, %v1102
        %v1105 = vperm.slane %v1080, 0
        %v1107 = vmul.f32 %v1103, %v1105
        %v1109 = vperm.slane %v1081, 0
        %v1111 = vadd.f32 %v1107, %v1109
        %s1112 = scalar_lea.vmem %s3, 32
        %v1113 = vld [vmem:[%s1112] sm:$0xff]
        %v1114 = vld [vmem:[%s1112 + $0x8] sm:$0xff]
        %v1115 = vld [vmem:[%s1112 + $0x10] sm:$0xff]
        %v1116 = vld [vmem:[%s1112 + $0x18] sm:$0xff]
        %s1117 = scalar_lea.vmem %s6, 1
        %v1118 = vld [vmem:[%s1117] sm:$0x1]
        %v1120 = vperm.slane %v1118, 0
        %v1123 = vsel %vm730, %v1111, 0
        %1125 = vmatpush.msra.mxu0 0.0
        %1126 = vmatpush.msra.mxu0 0.0
        %1127 = vmatpush.msra.mxu0 0.0
        %1128 = vmatpush.msra.mxu0 0.0
        %1129 = vmatpush.msra.mxu0 0.0
        %1130 = vmatpush.msra.mxu0 0.0
        %1131 = vmatpush.msra.mxu0 0.0
        %1132 = vmatpush.msra.mxu0 0.0
        %1133 = vmatpush.msra.mxu0 0.0
        %1134 = vmatpush.msra.mxu0 0.0
        %1135 = vmatpush.msra.mxu0 0.0
        %1136 = vmatpush.msra.mxu0 0.0
        %1137 = vmatpush.msra.mxu0 %v1116
        %1138 = vmatpush.msra.mxu0 %v1115
        %1139 = vmatpush.msra.mxu0 %v1114
        %1140 = vmatpush.msra.mxu0 %v1113
        %1141 = vmatmul.f32.gmra.mxu0 %v1123
        %v1142 = vpop.f32.mrf.mxu0
        %v1143 = vadd.f32 %v1120, %v1142
        %1144 = vdwg.mxu0
        %s1145 = scalar_lea.vmem %s4, 32
        %v1146 = vld [vmem:[%s1145] sm:$0xff]
        %v1147 = vld [vmem:[%s1145 + $0x8] sm:$0xff]
        %v1148 = vld [vmem:[%s1145 + $0x10] sm:$0xff]
        %v1149 = vld [vmem:[%s1145 + $0x18] sm:$0xff]
        %s1150 = scalar_lea.vmem %s7, 1
        %v1151 = vld [vmem:[%s1150] sm:$0x1]
        %v1153 = vperm.slane %v1151, 0
        %1155 = vmatpush.msra.mxu0 0.0
        %1156 = vmatpush.msra.mxu0 0.0
        %1157 = vmatpush.msra.mxu0 0.0
        %1158 = vmatpush.msra.mxu0 0.0
        %1159 = vmatpush.msra.mxu0 0.0
        %1160 = vmatpush.msra.mxu0 0.0
        %1161 = vmatpush.msra.mxu0 0.0
        %1162 = vmatpush.msra.mxu0 0.0
        %1163 = vmatpush.msra.mxu0 0.0
        %1164 = vmatpush.msra.mxu0 0.0
        %1165 = vmatpush.msra.mxu0 0.0
        %1166 = vmatpush.msra.mxu0 0.0
        %1167 = vmatpush.msra.mxu0 %v1149
        %1168 = vmatpush.msra.mxu0 %v1148
        %1169 = vmatpush.msra.mxu0 %v1147
        %1170 = vmatpush.msra.mxu0 %v1146
        %1171 = vmatmul.f32.gmra.mxu0 %v1123
        %v1172 = vpop.f32.mrf.mxu0
        %v1173 = vadd.f32 %v1153, %v1172
        %1174 = vdwg.mxu0
        %s1175 = scalar_lea.vmem %s5, 32
        %v1176 = vld [vmem:[%s1175] sm:$0xff]
        %v1177 = vld [vmem:[%s1175 + $0x8] sm:$0xff]
        %v1178 = vld [vmem:[%s1175 + $0x10] sm:$0xff]
        %v1179 = vld [vmem:[%s1175 + $0x18] sm:$0xff]
        %s1180 = scalar_lea.vmem %s8, 1
        %v1181 = vld [vmem:[%s1180] sm:$0x1]
        %v1183 = vperm.slane %v1181, 0
        %1185 = vmatpush.msra.mxu0 0.0
        %1186 = vmatpush.msra.mxu0 0.0
        %1187 = vmatpush.msra.mxu0 0.0
        %1188 = vmatpush.msra.mxu0 0.0
        %1189 = vmatpush.msra.mxu0 0.0
        %1190 = vmatpush.msra.mxu0 0.0
        %1191 = vmatpush.msra.mxu0 0.0
        %1192 = vmatpush.msra.mxu0 0.0
        %1193 = vmatpush.msra.mxu0 0.0
        %1194 = vmatpush.msra.mxu0 0.0
        %1195 = vmatpush.msra.mxu0 0.0
        %1196 = vmatpush.msra.mxu0 0.0
        %1197 = vmatpush.msra.mxu0 %v1179
        %1198 = vmatpush.msra.mxu0 %v1178
        %1199 = vmatpush.msra.mxu0 %v1177
        %1200 = vmatpush.msra.mxu0 %v1176
        %1201 = vmatmul.f32.gmra.mxu0 %v1123
        %v1202 = vpop.f32.mrf.mxu0
        %v1203 = vadd.f32 %v1183, %v1202
        %1204 = vdwg.mxu0
        %v1205 = vmul.f32 %v1143, %v810
        %v1207 = vsel %vm730, %v1205, 0
        %v1210 = vsel %vm730, %v1173, 0
        %1212 = vmatpush.xpose.msra.mxu0 0.0
        %1213 = vmatpush.xpose.msra.mxu0 0.0
        %1214 = vmatpush.xpose.msra.mxu0 0.0
        %1215 = vmatpush.xpose.msra.mxu0 0.0
        %1216 = vmatpush.xpose.msra.mxu0 0.0
        %1217 = vmatpush.xpose.msra.mxu0 0.0
        %1218 = vmatpush.xpose.msra.mxu0 0.0
        %1219 = vmatpush.xpose.msra.mxu0 0.0
        %1220 = vmatpush.xpose.msra.mxu0 0.0
        %1221 = vmatpush.xpose.msra.mxu0 0.0
        %1222 = vmatpush.xpose.msra.mxu0 0.0
        %1223 = vmatpush.xpose.msra.mxu0 0.0
        %1224 = vmatpush.xpose.msra.mxu0 0.0
        %1225 = vmatpush.xpose.msra.mxu0 0.0
        %1226 = vmatpush.xpose.msra.mxu0 0.0
        %1227 = vmatpush.xpose.msra.mxu0 %v1210
        %1228 = vmatmul.f32.gmra.mxu0 %v1207
        %v1229 = vpop.f32.mrf.mxu0
        %v1230 = vadd.f32 0.0, %v1229
        %1231 = vdwg.mxu0
        %v1232 = vmul.f32 %v1230, 0.25
        %v1233 = vadd.f32 %v1232, %v720
        %v1234 = vsel %vm840, %v1233, -inf
        %1235 = vmax.xlane.f32.xlu0 %v1234
        %v1236 = vpop.xlane.xlu0 %1235
        %v1237 = vsub.f32 %v1233, %v1236
        %v1238 = vmul.f32 %v1237, 1.442695
        %v1239 = vpow.pop %v1238
        %v1240 = vsel %vm840, %v1239, 0.0
        %1241 = vadd.xlane.f32.xlu0 %v1240
        %v1242 = vpop.xlane.xlu0 %1241
        %v1243 = vrcp.pop %v1242
        %v1244 = vmul.f32 %v1239, %v1243
        %v1246 = vsel %vm840, %v1244, 0
        %1248 = vmatpush.msra.mxu0 0.0
        %1249 = vmatpush.msra.mxu0 0.0
        %1250 = vmatpush.msra.mxu0 0.0
        %1251 = vmatpush.msra.mxu0 0.0
        %1252 = vmatpush.msra.mxu0 0.0
        %1253 = vmatpush.msra.mxu0 0.0
        %1254 = vmatpush.msra.mxu0 0.0
        %1255 = vmatpush.msra.mxu0 0.0
        %1256 = vmatpush.msra.mxu0 0.0
        %1257 = vmatpush.msra.mxu0 0.0
        %1258 = vmatpush.msra.mxu0 0.0
        %1259 = vmatpush.msra.mxu0 0.0
        %1260 = vmatpush.msra.mxu0 0.0
        %1261 = vmatpush.msra.mxu0 0.0
        %1262 = vmatpush.msra.mxu0 0.0
        %1263 = vmatpush.msra.mxu0 %v1203
        %1264 = vmatmul.f32.gmra.mxu0 %v1246
        %v1265 = vpop.f32.mrf.mxu0
        %v1266 = vadd.f32 0.0, %v1265
        %1267 = vdwg.mxu0
        %v1268 = vmul.f32 %v1266, %v810
        %v1269 = vadd.f32 %v1268, 0.0
        %v1270 = vmul.f32 %v1143, %v877
        %v1272 = vsel %vm730, %v1270, 0
        %1274 = vmatpush.xpose.msra.mxu0 0.0
        %1275 = vmatpush.xpose.msra.mxu0 0.0
        %1276 = vmatpush.xpose.msra.mxu0 0.0
        %1277 = vmatpush.xpose.msra.mxu0 0.0
        %1278 = vmatpush.xpose.msra.mxu0 0.0
        %1279 = vmatpush.xpose.msra.mxu0 0.0
        %1280 = vmatpush.xpose.msra.mxu0 0.0
        %1281 = vmatpush.xpose.msra.mxu0 0.0
        %1282 = vmatpush.xpose.msra.mxu0 0.0
        %1283 = vmatpush.xpose.msra.mxu0 0.0
        %1284 = vmatpush.xpose.msra.mxu0 0.0
        %1285 = vmatpush.xpose.msra.mxu0 0.0
        %1286 = vmatpush.xpose.msra.mxu0 0.0
        %1287 = vmatpush.xpose.msra.mxu0 0.0
        %1288 = vmatpush.xpose.msra.mxu0 0.0
        %1289 = vmatpush.xpose.msra.mxu0 %v1210
        %1290 = vmatmul.f32.gmra.mxu0 %v1272
        %v1291 = vpop.f32.mrf.mxu0
        %v1292 = vadd.f32 0.0, %v1291
        %1293 = vdwg.mxu0
        %v1294 = vmul.f32 %v1292, 0.25
        %v1295 = vadd.f32 %v1294, %v720
        %v1296 = vsel %vm840, %v1295, -inf
        %1297 = vmax.xlane.f32.xlu0 %v1296
        %v1298 = vpop.xlane.xlu0 %1297
        %v1299 = vsub.f32 %v1295, %v1298
        %v1300 = vmul.f32 %v1299, 1.442695
        %v1301 = vpow.pop %v1300
        %v1302 = vsel %vm840, %v1301, 0.0
        %1303 = vadd.xlane.f32.xlu0 %v1302
        %v1304 = vpop.xlane.xlu0 %1303
        %v1305 = vrcp.pop %v1304
        %v1306 = vmul.f32 %v1301, %v1305
        %v1308 = vsel %vm840, %v1306, 0
        %1310 = vmatpush.msra.mxu0 0.0
        %1311 = vmatpush.msra.mxu0 0.0
        %1312 = vmatpush.msra.mxu0 0.0
        %1313 = vmatpush.msra.mxu0 0.0
        %1314 = vmatpush.msra.mxu0 0.0
        %1315 = vmatpush.msra.mxu0 0.0
        %1316 = vmatpush.msra.mxu0 0.0
        %1317 = vmatpush.msra.mxu0 0.0
        %1318 = vmatpush.msra.mxu0 0.0
        %1319 = vmatpush.msra.mxu0 0.0
        %1320 = vmatpush.msra.mxu0 0.0
        %1321 = vmatpush.msra.mxu0 0.0
        %1322 = vmatpush.msra.mxu0 0.0
        %1323 = vmatpush.msra.mxu0 0.0
        %1324 = vmatpush.msra.mxu0 0.0
        %1325 = vmatpush.msra.mxu0 %v1203
        %1326 = vmatmul.f32.gmra.mxu0 %v1308
        %v1327 = vpop.f32.mrf.mxu0
        %v1328 = vadd.f32 0.0, %v1327
        %1329 = vdwg.mxu0
        %v1330 = vmul.f32 %v1328, %v877
        %v1331 = vadd.f32 %v1269, %v1330
        %s1332 = scalar_lea.vmem [#allocation2], 32
        %v1333 = vld [vmem:[%s1332] sm:$0xff]
        %v1334 = vld [vmem:[%s1332 + $0x8] sm:$0xff]
        %v1335 = vld [vmem:[%s1332 + $0x10] sm:$0xff]
        %v1336 = vld [vmem:[%s1332 + $0x18] sm:$0xff]
        %s1337 = scalar_lea.vmem %s10, 1
        %v1338 = vld [vmem:[%s1337] sm:$0x1]
        %v1340 = vperm.slane %v1338, 0
        %v1343 = vsel %vm730, %v1331, 0
        %1345 = vmatpush.msra.mxu0 0.0
        %1346 = vmatpush.msra.mxu0 0.0
        %1347 = vmatpush.msra.mxu0 0.0
        %1348 = vmatpush.msra.mxu0 0.0
        %1349 = vmatpush.msra.mxu0 0.0
        %1350 = vmatpush.msra.mxu0 0.0
        %1351 = vmatpush.msra.mxu0 0.0
        %1352 = vmatpush.msra.mxu0 0.0
        %1353 = vmatpush.msra.mxu0 0.0
        %1354 = vmatpush.msra.mxu0 0.0
        %1355 = vmatpush.msra.mxu0 0.0
        %1356 = vmatpush.msra.mxu0 0.0
        %1357 = vmatpush.msra.mxu0 %v1336
        %1358 = vmatpush.msra.mxu0 %v1335
        %1359 = vmatpush.msra.mxu0 %v1334
        %1360 = vmatpush.msra.mxu0 %v1333
        %1361 = vmatmul.f32.gmra.mxu0 %v1343
        %v1362 = vpop.f32.mrf.mxu0
        %v1363 = vadd.f32 %v1340, %v1362
        %1364 = vdwg.mxu0
        %v1365 = vadd.f32 %v1111, %v1363
        %s1366 = scalar_lea.vmem %s11, 1
        %v1367 = vld [vmem:[%s1366] sm:$0x1]
        %s1368 = scalar_lea.vmem %s12, 1
        %v1369 = vld [vmem:[%s1368] sm:$0x1]
        %v1370 = vsel %vm730, %v1365, 0.0
        %1371 = vadd.xlane.f32.xlu0 %v1370
        %v1372 = vpop.xlane.xlu0 %1371
        %v1373 = vmul.f32 %v1372, %v983
        %v1374 = vsub.f32 %v1365, %v1373
        %v1375 = vmul.f32 %v1374, %v1374
        %v1376 = vsel %vm730, %v1375, 0.0
        %1377 = vadd.xlane.f32.xlu0 %v1376
        %v1378 = vpop.xlane.xlu0 %1377
        %v1379 = vmul.f32 %v1378, %v983
        %v1380 = vadd.f32 %v1379, 1e-05
        %v1381 = vrsqrt.pop %v1380
        %v1382 = vmul.f32 %v1381, %v1380
        %v1383 = vmul.f32 %v1382, %v1381
        %v1384 = vmul.f32 0.5, %v1383
        %v1385 = vsub.f32 1.5, %v1384
        %v1386 = vmul.f32 %v1381, %v1385
        %vm1387 = vweird.f32 %v1380
        %vm1388 = vweird.f32 %v1381
        %vm1389 = vmor %vm1387, %vm1388
        %v1390 = vsel %vm1389, %v1381, %v1386
        %v1391 = vmul.f32 %v1374, %v1390
        %v1393 = vperm.slane %v1367, 0
        %v1395 = vmul.f32 %v1391, %v1393
        %v1397 = vperm.slane %v1369, 0
        %v1399 = vadd.f32 %v1395, %v1397
        %s1400 = scalar_lea.vmem [#allocation5], 32
        %v1401 = vld [vmem:[%s1400] sm:$0xff]
        %v1402 = vld [vmem:[%s1400 + $0x8] sm:$0xff]
        %v1403 = vld [vmem:[%s1400 + $0x10] sm:$0xff]
        %v1404 = vld [vmem:[%s1400 + $0x18] sm:$0xff]
        %s1405 = scalar_lea.vmem [#allocation7], 1
        %v1406 = vld [vmem:[%s1405] sm:$0x1]
        %v1408 = vperm.slane %v1406, 0
        %v1411 = vsel %vm730, %v1399, 0
        %1413 = vmatpush.msra.mxu0 0.0
        %1414 = vmatpush.msra.mxu0 0.0
        %1415 = vmatpush.msra.mxu0 0.0
        %1416 = vmatpush.msra.mxu0 0.0
        %1417 = vmatpush.msra.mxu0 0.0
        %1418 = vmatpush.msra.mxu0 0.0
        %1419 = vmatpush.msra.mxu0 0.0
        %1420 = vmatpush.msra.mxu0 0.0
        %1421 = vmatpush.msra.mxu0 0.0
        %1422 = vmatpush.msra.mxu0 0.0
        %1423 = vmatpush.msra.mxu0 0.0
        %1424 = vmatpush.msra.mxu0 0.0
        %1425 = vmatpush.msra.mxu0 %v1404
        %1426 = vmatpush.msra.mxu0 %v1403
        %1427 = vmatpush.msra.mxu0 %v1402
        %1428 = vmatpush.msra.mxu0 %v1401
        %1429 = vmatmul.f32.gmra.mxu0 %v1411
        %v1430 = vpop.f32.mrf.mxu0
        %v1431 = vadd.f32 %v1408, %v1430
        %1432 = vdwg.mxu0
        %v1433 = vmax.f32 %v1431, 0.0
        %s1434 = scalar_lea.vmem %s15, 64
        %v1435 = vld [vmem:[%s1434] sm:$0xff]
        %v1436 = vld [vmem:[%s1434 + $0x8] sm:$0xff]
        %v1437 = vld [vmem:[%s1434 + $0x10] sm:$0xff]
        %v1438 = vld [vmem:[%s1434 + $0x18] sm:$0xff]
        %v1439 = vld [vmem:[%s1434 + $0x20] sm:$0xff]
        %v1440 = vld [vmem:[%s1434 + $0x28] sm:$0xff]
        %v1441 = vld [vmem:[%s1434 + $0x30] sm:$0xff]
        %v1442 = vld [vmem:[%s1434 + $0x38] sm:$0xff]
        %s1443 = scalar_lea.vmem [#allocation8], 1
        %v1444 = vld [vmem:[%s1443] sm:$0x1]
        %v1446 = vperm.slane %v1444, 0
        %v1449 = vsel %vm1055, %v1433, 0
        %1451 = vmatpush.msra.mxu0 0.0
        %1452 = vmatpush.msra.mxu0 0.0
        %1453 = vmatpush.msra.mxu0 0.0
        %1454 = vmatpush.msra.mxu0 0.0
        %1455 = vmatpush.msra.mxu0 0.0
        %1456 = vmatpush.msra.mxu0 0.0
        %1457 = vmatpush.msra.mxu0 0.0
        %1458 = vmatpush.msra.mxu0 0.0
        %1459 = vmatpush.msra.mxu0 %v1442
        %1460 = vmatpush.msra.mxu0 %v1441
        %1461 = vmatpush.msra.mxu0 %v1440
        %1462 = vmatpush.msra.mxu0 %v1439
        %1463 = vmatpush.msra.mxu0 %v1438
        %1464 = vmatpush.msra.mxu0 %v1437
        %1465 = vmatpush.msra.mxu0 %v1436
        %1466 = vmatpush.msra.mxu0 %v1435
        %1467 = vmatmul.f32.gmra.mxu0 %v1449
        %v1468 = vpop.f32.mrf.mxu0
        %v1469 = vadd.f32 %v1446, %v1468
        %1470 = vdwg.mxu0
        %v1471 = vadd.f32 %v1399, %v1469
        %s1472 = scalar_lea.vmem %s17, 1
        %v1473 = vld [vmem:[%s1472] sm:$0x1]
        %s1474 = scalar_lea.vmem %s18, 1
        %v1475 = vld [vmem:[%s1474] sm:$0x1]
        %v1476 = vsel %vm730, %v1471, 0.0
        %1477 = vadd.xlane.f32.xlu0 %v1476
        %v1478 = vpop.xlane.xlu0 %1477
        %v1479 = vmul.f32 %v1478, %v983
        %v1480 = vsub.f32 %v1471, %v1479
        %v1481 = vmul.f32 %v1480, %v1480
        %v1482 = vsel %vm730, %v1481, 0.0
        %1483 = vadd.xlane.f32.xlu0 %v1482
        %v1484 = vpop.xlane.xlu0 %1483
        %v1485 = vmul.f32 %v1484, %v983
        %v1486 = vadd.f32 %v1485, 1e-05
        %v1487 = vrsqrt.pop %v1486
        %v1488 = vmul.f32 %v1487, %v1486
        %v1489 = vmul.f32 %v1488, %v1487
        %v1490 = vmul.f32 0.5, %v1489
        %v1491 = vsub.f32 1.5, %v1490
        %v1492 = vmul.f32 %v1487, %v1491
        %vm1493 = vweird.f32 %v1486
        %vm1494 = vweird.f32 %v1487
        %vm1495 = vmor %vm1493, %vm1494
        %v1496 = vsel %vm1495, %v1487, %v1492
        %v1497 = vmul.f32 %v1480, %v1496
        %v1499 = vperm.slane %v1473, 0
        %v1501 = vmul.f32 %v1497, %v1499
        %v1503 = vperm.slane %v1475, 0
        %v1505 = vadd.f32 %v1501, %v1503
        %v1506 = vld [vmem:[%s19] sm:$0xff]
        %v1507 = vld [vmem:[%s19 + $0x8] sm:$0xff]
        %v1508 = vld [vmem:[%s19 + $0x10] sm:$0xff]
        %v1509 = vld [vmem:[%s19 + $0x18] sm:$0xff]
        %v1510 = vld [vmem:[%s20] sm:$0x1]
        %v1512 = vperm.slane %v1510, 0
        %v1515 = vsel %vm730, %v1505, 0
        %1517 = vmatpush.msra.mxu0 0.0
        %1518 = vmatpush.msra.mxu0 0.0
        %1519 = vmatpush.msra.mxu0 0.0
        %1520 = vmatpush.msra.mxu0 0.0
        %1521 = vmatpush.msra.mxu0 0.0
        %1522 = vmatpush.msra.mxu0 0.0
        %1523 = vmatpush.msra.mxu0 0.0
        %1524 = vmatpush.msra.mxu0 0.0
        %1525 = vmatpush.msra.mxu0 0.0
        %1526 = vmatpush.msra.mxu0 0.0
        %1527 = vmatpush.msra.mxu0 0.0
        %1528 = vmatpush.msra.mxu0 0.0
        %1529 = vmatpush.msra.mxu0 %v1509
        %1530 = vmatpush.msra.mxu0 %v1508
        %1531 = vmatpush.msra.mxu0 %v1507
        %1532 = vmatpush.msra.mxu0 %v1506
        %1533 = vmatmul.f32.gmra.mxu0 %v1515
        %v1534 = vpop.f32.mrf.mxu0
        %v1535 = vadd.f32 %v1512, %v1534
        %1536 = vdwg.mxu0
        %1537 = vst [vmem:[%s714] sm:$0xff] %v1535
        %s1538 = sand.u32 %s492, 1
        %s1539 = scalar_lea.sflag [#allocation4], %s1538
        %s1540 = sand.u32 %s492, 1
        %s1541 = smul.addr %s1540, 8
        %s1542 = scalar_lea.vmem [#allocation10], %s1541
        // Predicated region
        $region121: #{transformer_forward.1} parent=103 // pred_check
          %p1543 = pneg %p502
        $region122: #{transformer_forward.1} parent=103 // pred_check_branch
          %1545 = sbr.rel (%p1543) target = $region124
        $region123: #{transformer_forward.1} parent=103 // pred_region
          %1547 = vsyncadd %s1539, 0
          %s1548 = smul.addr %s38, 8
          %s1549 = scalar_lea.hbm %s21, %s1548
          %s1551 = sshll.u32 %s1542, 4
          %s1552 = int_to_ptr.vmem [resolvable:$true] %s1551
          %s1553 = sshll.u32 %s1549, 4
          %s1554 = int_to_ptr.hbm [resolvable:$true] %s1553
          %1556 = dma.vmem_to_hbm [thread:$0]  %s1552, 128, %s1554, %s1539
        $region124: #{transformer_forward.1} parent=103 // pred_fallthru
          _
      $region104: #{transformer_forward.1} parent=5 // pred_fallthru
        _
      %p1557 = scmp.le.s32.totalorder 2, %s33
      // Predicated region
      $region125: #{transformer_forward.1} parent=5 // pred_check
        %p1558 = pneg %p1557
      $region126: #{transformer_forward.1} parent=5 // pred_check_branch
        %1560 = sbr.rel (%p1558) target = $region128
      $region127: #{transformer_forward.1} parent=5 // pred_region
        %s1561 = ssub.s32 %s33, 2
        // Predicated region
        $region129: #{transformer_forward.1} parent=127 // pred_check
          %p1562 = pneg %p508
        $region130: #{transformer_forward.1} parent=127 // pred_check_branch
          %1564 = sbr.rel (%p1562) target = $region132
        $region131: #{transformer_forward.1} parent=127 // pred_region
          %s1565 = sand.u32 %s493, 1
          %s1566 = scalar_lea.sflag [#allocation4], %s1565
          %s1567 = sand.u32 %s493, 1
          %s1568 = smul.addr %s1567, 8
          %s1569 = scalar_lea.vmem [#allocation10], %s1568
          %1571 = dma.done %s1566, 128
        $region132: #{transformer_forward.1} parent=127 // pred_fallthru
          _
      $region128: #{transformer_forward.1} parent=5 // pred_fallthru
        _
    $region6: #{transformer_forward.1} parent=1 // loop_footer
      %s37 = sadd.s32 1, %s33
    $region7: #{transformer_forward.1} parent=1 // loop_footer_branch
      %32 = sbr.rel target = $region3
    $region8: #{transformer_forward.1} parent=1 // loop_exit
      _
    %1572 = vsyncpa [#allocation3], 1
    %s1573 = scalar_lea.sflag [#allocation3], 1
    %1574 = vsyncpa %s1573, 1
    %1575 = vsyncpa [#allocation6], 1
    %1576 = vsyncpa [#allocation9], 1
    %1577 = vsyncpa [#allocation4], 1
    %s1578 = scalar_lea.sflag [#allocation4], 1
    %1579 = vsyncpa %s1578, 1

</llo_original>
